<compile_context>
chip_gen: v6e
topology: v6e:2x2x1
jax: 0.10.0
libtpu: 0.0.40
codegen_flags: <defaults>
</compile_context>

<pallas_src>
import functools

import jax
import jax.numpy as jnp
from jax.experimental import pallas as pl
from jax.experimental.pallas import tpu as pltpu

N_BINS = 15


def _make_kernel(n_valid, tile_n):
    """Builds the per-tile kernel; n_valid / tile_n are static Python ints."""
    inv_nb = 1.0 / N_BINS

    def kernel(temp_ref, logits_ref, labels_ref, out_ref, bins_ref):
        # logits_ref : (tile_n, C) VMEM, input dtype (f32 or bf16)
        # labels_ref : (tile_n, 1) VMEM int32
        # temp_ref   : (1, 1) SMEM f32
        # out_ref    : (tile_n, 2) VMEM f32   packed [confidence | hit]
        # bins_ref   : (3, N_BINS) VMEM f32   per-tile partial bin sums
        i = pl.program_id(0)
        x = logits_ref[...]                              # (T, C), input dtype
        t, c = x.shape

        # Temperature scaling via a hoisted scalar reciprocal (no vector divide).
        # The scale is positive, so max / argmax are taken on the raw logits in the
        # input dtype; only the exp path runs in f32.
        inv_t = 1.0 / temp_ref[0, 0]

        col_max = jnp.max(x, axis=1, keepdims=True)                      # (T, 1)
        # softmax never materialized: the max element contributes exp(0)=1, so
        # max-prob = 1 / sum(exp((x - max)/T)).
        e = jnp.exp((x.astype(jnp.float32) - col_max.astype(jnp.float32)) * inv_t)
        sum_e = jnp.sum(e, axis=1, keepdims=True)                        # (T, 1)
        conf = 1.0 / sum_e                                               # exact divide

        lane = jax.lax.broadcasted_iota(jnp.int32, (t, c), 1)
        # first-max-index tie break matches torch.max
        pred = jnp.min(jnp.where(x == col_max, lane, c), axis=1, keepdims=True)
        hit = (pred == labels_ref[...]).astype(jnp.float32)              # (T, 1)

        # Partial last tile: Pallas pads the block, padded rows may hold garbage that
        # exp() turned into Inf/NaN -> gate with where() (multiply-by-0 is not enough).
        row = jax.lax.broadcasted_iota(jnp.int32, (t, 1), 0) + i * tile_n
        valid = row < n_valid
        conf_v = jnp.where(valid, conf, 0.0)
        hit_v = jnp.where(valid, hit, 0.0)

        # One packed (T, 2) output block -> a single output DMA per tile.
        out_ref[:, 0:1] = conf_v
        out_ref[:, 1:2] = hit_v

        # Single-pass 15-bin partial statistics for this tile.  conf_v == 0 on padded
        # rows never lands in any (lo, hi] bin, so they contribute nothing.
        b = jax.lax.broadcasted_iota(jnp.int32, (1, N_BINS), 1).astype(jnp.float32)
        lo = b * inv_nb
        hi = (b + 1.0) * inv_nb
        in_bin = jnp.logical_and(conf_v > lo, conf_v <= hi).astype(jnp.float32)  # (T, NB)
        # Three sublane-axis reductions (they share the in_bin loads); could be fused
        # into one MXU dot_general if this ever dominates.
        bins_ref[0:1, :] = jnp.sum(in_bin, axis=0, keepdims=True)
        bins_ref[1:2, :] = jnp.sum(in_bin * conf_v, axis=0, keepdims=True)
        bins_ref[2:3, :] = jnp.sum(in_bin * hit_v, axis=0, keepdims=True)

    return kernel


def _choose_tile_n(n, c):
    """~2 MiB of lane-padded VMEM per tile-sized live buffer (v7x-safe budget)."""
    lane_c = max(128, -(-c // 128) * 128)           # minor dim pads to 128 lanes
    tile = (2 * 1024 * 1024) // (lane_c * 4)        # f32 working rows dominate VMEM
    tile = max(512, min(8192, (tile // 512) * 512))
    tile = min(tile, max(8, -(-n // 8) * 8))        # never exceed the (8-aligned) batch
    return int(tile)


@functools.partial(jax.jit, static_argnames=("tile_n",))
def _run_kernel(logits, labels, temperature, *, tile_n=None):
    """Returns (confidences(N,), hits(N,) float, ece(1,))."""
    n, c = logits.shape
    if tile_n is None:
        tile_n = _choose_tile_n(n, c)
    assert tile_n % 8 == 0, "tile_n must be a multiple of 8 (sublane tiling)"
    n_tiles = -(-n // tile_n)

    labels2d = labels.astype(jnp.int32).reshape(n, 1)          # free relayout
    temp = jnp.asarray(temperature, dtype=jnp.float32).reshape(1, 1)

    out, parts = pl.pallas_call(
        _make_kernel(n, tile_n),
        grid=(n_tiles,),
        out_shape=(
            jax.ShapeDtypeStruct((n, 2), jnp.float32),               # [conf | hit]
            jax.ShapeDtypeStruct((n_tiles, 3, N_BINS), jnp.float32),  # per-tile bins
        ),
        in_specs=[
            pl.BlockSpec(memory_space=pltpu.MemorySpace.SMEM),        # temperature
            # natural (N, C) layout: no transpose / pad pass over HBM.
            # (pipeline_mode=pl.Buffered(3) is an option on v5e if DMA is exposed.)
            pl.BlockSpec((tile_n, c), lambda i: (i, 0)),
            pl.BlockSpec((tile_n, 1), lambda i: (i, 0)),              # labels
        ],
        out_specs=(
            pl.BlockSpec((tile_n, 2), lambda i: (i, 0)),
            pl.BlockSpec((None, 3, N_BINS), lambda i: (i, 0, 0)),     # per-tile partials
        ),
        compiler_params=pltpu.CompilerParams(
            # no carried state -> the batch axis can be split across v7x's two cores
            dimension_semantics=("parallel",),
            vmem_limit_bytes=32 * 1024 * 1024,
        ),
    )(temp, logits, labels2d)

    conf = out[:, 0]
    hits = out[:, 1]

    # Tiny finalize in XLA (n_tiles x 45 floats): reduce per-tile partials -> ECE.
    sums = jnp.sum(parts, axis=0)                    # (3, N_BINS)
    cnt, csum, hsum = sums[0], sums[1], sums[2]
    nonempty = cnt > 0.0
    safe = jnp.where(nonempty, cnt, 1.0)
    gap = jnp.abs(csum / safe - hsum / safe)
    ece = jnp.sum(jnp.where(nonempty, gap * (cnt / jnp.float32(n)), 0.0))
    return conf, hits, ece.reshape(1)


class TemperatureScale:
    """JAX/Pallas equivalent of the PyTorch Temperature_scale module (use_ece=True)."""

    def __init__(self, tile_n=None):
        # nn.Parameter(torch.ones(1, dtype=torch.float64) * 1.5) -> f32 on TPU
        self.temperature = 1.5
        self.training = True
        self.need_calibration_train = True
        self.require_iterative_training = True
        self.tile_n = tile_n            # None -> auto-size (~2 MiB blocks)

    def __call__(self, simple_vector, label_list):
        conf, hits, ece = _run_kernel(simple_vector, label_list, self.temperature,
                                      tile_n=self.tile_n)
        if self.training:
            return ece                                  # shape (1,), like torch.zeros(1)+...
        # TODO(synk): sort has no clean Pallas TPU primitive; argsort stays in XLA.
        order = jnp.argsort(conf)
        return conf[order], hits[order].astype(bool), True


# ----------------------------- reference / self-test -----------------------------

def _ece_from(conf, hits):
    """15-bin ECE with the same f32 bin-boundary arithmetic as the kernel."""
    n = conf.shape[0]
    inv_nb = jnp.float32(1.0 / N_BINS)
    ece = jnp.float32(0.0)
    for b in range(N_BINS):
        lo = jnp.float32(b) * inv_nb
        hi = jnp.float32(b + 1) * inv_nb
        m = ((conf > lo) & (conf <= hi)).astype(jnp.float32)
        cnt = jnp.sum(m)
        safe = jnp.where(cnt > 0, cnt, 1.0)
        ece += jnp.where(
            cnt > 0,
            jnp.abs(jnp.sum(conf * m) / safe - jnp.sum(hits * m) / safe) * (cnt / n),
            0.0,
        )
    return ece


def _reference(logits, labels, temperature, training):
    """Pure-JAX reference mirroring the kernel's f32 arithmetic."""
    x = logits.astype(jnp.float32)
    inv_t = jnp.float32(1.0) / jnp.float32(temperature)
    col_max = jnp.max(x, axis=1, keepdims=True)
    conf = 1.0 / jnp.sum(jnp.exp((x - col_max) * inv_t), axis=1)
    pred = jnp.argmax(x, axis=1)          # positive temperature preserves argmax
    hits = (pred == labels).astype(jnp.float32)
    if training:
        return jnp.reshape(_ece_from(conf, hits), (1,))
    order = jnp.argsort(conf)
    return conf[order], hits[order].astype(bool), True


if __name__ == "__main__":
    key = jax.random.PRNGKey(0)
    k_logits, k_labels = jax.random.split(key)
    N, C = 200, 16          # small calibration set: 200 samples, 16 classes
    logits = jax.random.normal(k_logits, (N, C), dtype=jnp.float32) * 3.0
    labels = jax.random.randint(k_labels, (N,), 0, C, dtype=jnp.int32)

    # tile_n=128 -> 2-tile grid with a masked partial last tile (exercises the
    # parallel-grid per-tile partial sums + tail masking). Leave tile_n=None in
    # production to auto-size ~2 MiB blocks (4096 rows at C=16).
    model = TemperatureScale(tile_n=128)

    # eval path: calibrated confidences + hits, sorted ascending by confidence
    model.training = False
    conf_s, hits_s, flag = model(logits, labels)
    jax.block_until_ready((conf_s, hits_s))
    ref_conf_s, ref_hits_s, _ = _reference(logits, labels, model.temperature, False)
    assert flag is True
    assert conf_s.shape == (N,) and hits_s.shape == (N,)
    assert jnp.allclose(conf_s, ref_conf_s, atol=1e-5), \
        float(jnp.max(jnp.abs(conf_s - ref_conf_s)))
    # permutation-robust hits check (ulp-close confidences may legally swap in the sort)
    assert int(jnp.sum(hits_s)) == int(jnp.sum(ref_hits_s))

    # training path: ECE loss
    model.training = True
    loss = model(logits, labels)
    jax.block_until_ready(loss)
    assert loss.shape == (1,)
    # tight check: re-bin the kernel's own confidences/hits outside the kernel
    ece_check = _ece_from(conf_s, hits_s.astype(jnp.float32))
    assert jnp.allclose(loss[0], ece_check, atol=1e-5), (float(loss[0]), float(ece_check))
    # loose end-to-end check against the fully independent reference
    ref_loss = _reference(logits, labels, model.temperature, True)
    assert jnp.allclose(loss, ref_loss, atol=1e-2), (loss, ref_loss)

    print("KERNEL_OK")
</pallas_src>

<mosaic_0001>
module attributes {stable_mosaic.version = 11 : i64} {
  func.func @kernel(%arg0: i32, %arg1: memref<1x1xf32, #tpu.memory_space<smem>>, %arg2: memref<128x16xf32, #tpu.memory_space<vmem>>, %arg3: memref<128x1xi32, #tpu.memory_space<vmem>>, %arg4: memref<128x2xf32, #tpu.memory_space<vmem>>, %arg5: memref<1x3x15xf32, #tpu.memory_space<vmem>>) attributes {dimension_semantics = [#tpu.dimension_semantics<parallel>], iteration_bounds = array<i64: 2>, scalar_prefetch = 0 : i64, scratch_operands = 0 : i64, tpu.core_type = #tpu.core_type<tc>, window_params = [{transform_indices = @transform_0, window_bounds = array<i64: 1, 1>}, {transform_indices = @transform_1, window_bounds = array<i64: 128, 16>}, {transform_indices = @transform_2, window_bounds = array<i64: 128, 1>}, {transform_indices = @transform_3, window_bounds = array<i64: 128, 2>}, {transform_indices = @transform_4, window_bounds = array<i64: 1, 3, 15>}]} {
    %c0 = arith.constant 0 : index
    %c0_0 = arith.constant 0 : index
    %0 = vector.load %arg2[%c0, %c0_0] : memref<128x16xf32, #tpu.memory_space<vmem>>, vector<128x16xf32>
    %c0_1 = arith.constant 0 : index
    %c0_2 = arith.constant 0 : index
    %1 = memref.load %arg1[%c0_1, %c0_2] : memref<1x1xf32, #tpu.memory_space<smem>>
    %cst = arith.constant 1.000000e+00 : f32
    %2 = arith.divf %cst, %1 : f32
    %cst_3 = arith.constant dense<0xFF800000> : vector<128xf32>
    %3 = vector.multi_reduction <maximumf>, %0, %cst_3 [1] : vector<128x16xf32> to vector<128xf32>
    %4 = vector.shape_cast %3 : vector<128xf32> to vector<128x1xf32>
    %5 = vector.broadcast %4 : vector<128x1xf32> to vector<128x16xf32>
    %6 = arith.subf %0, %5 : vector<128x16xf32>
    %7 = vector.broadcast %2 : f32 to vector<128x16xf32>
    %8 = arith.mulf %6, %7 : vector<128x16xf32>
    %9 = math.exp %8 : vector<128x16xf32>
    %cst_4 = arith.constant dense<0.000000e+00> : vector<128xf32>
    %10 = vector.multi_reduction <add>, %9, %cst_4 [1] : vector<128x16xf32> to vector<128xf32>
    %11 = vector.shape_cast %10 : vector<128xf32> to vector<128x1xf32>
    %cst_5 = arith.constant 1.000000e+00 : f32
    %12 = vector.broadcast %cst_5 : f32 to vector<128x1xf32>
    %13 = arith.divf %12, %11 : vector<128x1xf32>
    %14 = tpu.iota {dimensions = array<i32: 1>} : vector<128x16xi32>
    %15 = vector.broadcast %4 : vector<128x1xf32> to vector<128x16xf32>
    %16 = arith.cmpf oeq, %0, %15 : vector<128x16xf32>
    %c16_i32 = arith.constant 16 : i32
    %17 = vector.broadcast %c16_i32 : i32 to vector<128x16xi32>
    %18 = arith.select %16, %14, %17 : vector<128x16xi1>, vector<128x16xi32>
    %cst_6 = arith.constant dense<2147483647> : vector<128xi32>
    %19 = vector.multi_reduction <minsi>, %18, %cst_6 [1] : vector<128x16xi32> to vector<128xi32>
    %20 = vector.shape_cast %19 : vector<128xi32> to vector<128x1xi32>
    %c0_7 = arith.constant 0 : index
    %c0_8 = arith.constant 0 : index
    %21 = vector.load %arg3[%c0_7, %c0_8] : memref<128x1xi32, #tpu.memory_space<vmem>>, vector<128x1xi32>
    %22 = arith.cmpi eq, %20, %21 : vector<128x1xi32>
    %23 = arith.extui %22 : vector<128x1xi1> to vector<128x1xi32>
    %24 = arith.sitofp %23 : vector<128x1xi32> to vector<128x1xf32>
    %25 = tpu.iota {dimensions = array<i32: 0>} : vector<128x1xi32>
    %c128_i32 = arith.constant 128 : i32
    %26 = arith.muli %arg0, %c128_i32 : i32
    %27 = vector.broadcast %26 : i32 to vector<128x1xi32>
    %28 = arith.addi %25, %27 : vector<128x1xi32>
    %c200_i32 = arith.constant 200 : i32
    %29 = vector.broadcast %c200_i32 : i32 to vector<128x1xi32>
    %30 = arith.cmpi slt, %28, %29 : vector<128x1xi32>
    %cst_9 = arith.constant 0.000000e+00 : f32
    %31 = vector.broadcast %cst_9 : f32 to vector<128x1xf32>
    %32 = arith.select %30, %13, %31 : vector<128x1xi1>, vector<128x1xf32>
    %cst_10 = arith.constant 0.000000e+00 : f32
    %33 = vector.broadcast %cst_10 : f32 to vector<128x1xf32>
    %34 = arith.select %30, %24, %33 : vector<128x1xi1>, vector<128x1xf32>
    %c0_11 = arith.constant 0 : index
    %c0_12 = arith.constant 0 : index
    %35 = vector.load %arg4[%c0_11, %c0_12] : memref<128x2xf32, #tpu.memory_space<vmem>>, vector<128x1xf32>
    tpu.vector_store %arg4[%c0_11, %c0_12], %32 {strides = array<i32>} : memref<128x2xf32, #tpu.memory_space<vmem>>, vector<128x1xf32>,
    %c0_13 = arith.constant 0 : index
    %c1 = arith.constant 1 : index
    %36 = vector.load %arg4[%c0_13, %c1] : memref<128x2xf32, #tpu.memory_space<vmem>>, vector<128x1xf32>
    tpu.vector_store %arg4[%c0_13, %c1], %34 {strides = array<i32>} : memref<128x2xf32, #tpu.memory_space<vmem>>, vector<128x1xf32>,
    %37 = tpu.iota {dimensions = array<i32: 1>} : vector<1x15xi32>
    %38 = arith.sitofp %37 : vector<1x15xi32> to vector<1x15xf32>
    %cst_14 = arith.constant 0.0666666701 : f32
    %39 = vector.broadcast %cst_14 : f32 to vector<1x15xf32>
    %40 = arith.mulf %38, %39 : vector<1x15xf32>
    %cst_15 = arith.constant 1.000000e+00 : f32
    %41 = vector.broadcast %cst_15 : f32 to vector<1x15xf32>
    %42 = arith.addf %38, %41 : vector<1x15xf32>
    %cst_16 = arith.constant 0.0666666701 : f32
    %43 = vector.broadcast %cst_16 : f32 to vector<1x15xf32>
    %44 = arith.mulf %42, %43 : vector<1x15xf32>
    %45 = vector.broadcast %32 : vector<128x1xf32> to vector<128x15xf32>
    %46 = vector.broadcast %40 : vector<1x15xf32> to vector<128x15xf32>
    %47 = arith.cmpf ogt, %45, %46 : vector<128x15xf32>
    %48 = vector.broadcast %32 : vector<128x1xf32> to vector<128x15xf32>
    %49 = vector.broadcast %44 : vector<1x15xf32> to vector<128x15xf32>
    %50 = arith.cmpf ole, %48, %49 : vector<128x15xf32>
    %51 = arith.andi %47, %50 : vector<128x15xi1>
    %52 = arith.extui %51 : vector<128x15xi1> to vector<128x15xi32>
    %53 = arith.sitofp %52 : vector<128x15xi32> to vector<128x15xf32>
    %cst_17 = arith.constant dense<0.000000e+00> : vector<15xf32>
    %54 = vector.multi_reduction <add>, %53, %cst_17 [0] : vector<128x15xf32> to vector<15xf32>
    %55 = vector.shape_cast %54 : vector<15xf32> to vector<1x15xf32>
    %c0_18 = arith.constant 0 : index
    %c0_19 = arith.constant 0 : index
    %c0_20 = arith.constant 0 : index
    %56 = vector.load %arg5[%c0_18, %c0_19, %c0_20] : memref<1x3x15xf32, #tpu.memory_space<vmem>>, vector<1x1x15xf32>
    %57 = vector.shape_cast %56 : vector<1x1x15xf32> to vector<1x15xf32>
    %58 = vector.shape_cast %55 : vector<1x15xf32> to vector<1x1x15xf32>
    tpu.vector_store %arg5[%c0_18, %c0_19, %c0_20], %58 {strides = array<i32>} : memref<1x3x15xf32, #tpu.memory_space<vmem>>, vector<1x1x15xf32>,
    %59 = vector.broadcast %32 : vector<128x1xf32> to vector<128x15xf32>
    %60 = arith.mulf %53, %59 : vector<128x15xf32>
    %cst_21 = arith.constant dense<0.000000e+00> : vector<15xf32>
    %61 = vector.multi_reduction <add>, %60, %cst_21 [0] : vector<128x15xf32> to vector<15xf32>
    %62 = vector.shape_cast %61 : vector<15xf32> to vector<1x15xf32>
    %c0_22 = arith.constant 0 : index
    %c1_23 = arith.constant 1 : index
    %c0_24 = arith.constant 0 : index
    %63 = vector.load %arg5[%c0_22, %c1_23, %c0_24] : memref<1x3x15xf32, #tpu.memory_space<vmem>>, vector<1x1x15xf32>
    %64 = vector.shape_cast %63 : vector<1x1x15xf32> to vector<1x15xf32>
    %65 = vector.shape_cast %62 : vector<1x15xf32> to vector<1x1x15xf32>
    tpu.vector_store %arg5[%c0_22, %c1_23, %c0_24], %65 {strides = array<i32>} : memref<1x3x15xf32, #tpu.memory_space<vmem>>, vector<1x1x15xf32>,
    %66 = vector.broadcast %34 : vector<128x1xf32> to vector<128x15xf32>
    %67 = arith.mulf %53, %66 : vector<128x15xf32>
    %cst_25 = arith.constant dense<0.000000e+00> : vector<15xf32>
    %68 = vector.multi_reduction <add>, %67, %cst_25 [0] : vector<128x15xf32> to vector<15xf32>
    %69 = vector.shape_cast %68 : vector<15xf32> to vector<1x15xf32>
    %c0_26 = arith.constant 0 : index
    %c2 = arith.constant 2 : index
    %c0_27 = arith.constant 0 : index
    %70 = vector.load %arg5[%c0_26, %c2, %c0_27] : memref<1x3x15xf32, #tpu.memory_space<vmem>>, vector<1x1x15xf32>
    %71 = vector.shape_cast %70 : vector<1x1x15xf32> to vector<1x15xf32>
    %72 = vector.shape_cast %69 : vector<1x15xf32> to vector<1x1x15xf32>
    tpu.vector_store %arg5[%c0_26, %c2, %c0_27], %72 {strides = array<i32>} : memref<1x3x15xf32, #tpu.memory_space<vmem>>, vector<1x1x15xf32>,
    return
  }
  func.func @transform_0(%arg0: i32) -> (i32, i32) {
    %c0_i32 = arith.constant 0 : i32
    %c0_i32_0 = arith.constant 0 : i32
    %c0_i32_1 = arith.constant 0 : i32
    return %c0_i32, %c0_i32_0 : i32, i32
  }
  func.func @transform_1(%arg0: i32) -> (i32, i32) {
    %c0_i32 = arith.constant 0 : i32
    %c0_i32_0 = arith.constant 0 : i32
    return %arg0, %c0_i32 : i32, i32
  }
  func.func @transform_2(%arg0: i32) -> (i32, i32) {
    %c0_i32 = arith.constant 0 : i32
    %c0_i32_0 = arith.constant 0 : i32
    return %arg0, %c0_i32 : i32, i32
  }
  func.func @transform_3(%arg0: i32) -> (i32, i32) {
    %c0_i32 = arith.constant 0 : i32
    %c0_i32_0 = arith.constant 0 : i32
    return %arg0, %c0_i32 : i32, i32
  }
  func.func @transform_4(%arg0: i32) -> (i32, i32, i32) {
    %c0_i32 = arith.constant 0 : i32
    %c0_i32_0 = arith.constant 0 : i32
    %c0_i32_1 = arith.constant 0 : i32
    return %arg0, %c0_i32, %c0_i32_0 : i32, i32, i32
  }
}

</mosaic_0001>

<llo_original>
// kernel: _run_kernel.1
$region0: #{_run_kernel.1}
  #allocation0 [shape = 'u32[]', space=smem, size = 0x4, offset = 0x4, fixed_abs, tag = 'smem constant byte address 0x4 - core index']
  #allocation1 [shape = 'u32[144,128]{1,0:T(1,128)}', space=vmem, size = 0x12000, scoped, tag = 'internal scratch']
  #allocation2 [shape = 'f32[1,1]{1,0:T(1,128)S(6)}', space=smem, size = 0x200, scoped, tag = 'scoped memory for _run_kernel.1']
  %s0 = inlined_call_operand.<no memory space> [shape: f32[1,1], index: 0, kind: input, shape index: {}]
  %s1 = inlined_call_operand.vmem [shape: f32[200,16], index: 1, kind: input, shape index: {}]
  %s2 = inlined_call_operand.vmem [shape: s32[200,1], index: 2, kind: input, shape index: {}]
  %s3 = inlined_call_operand.vmem [shape: f32[200,2], index: 3, kind: output, shape index: {0}]
  %s4 = inlined_call_operand.vmem [shape: f32[2,3,15], index: 4, kind: output, shape index: {1}]
  %5 = xla_tuple %s3, %s4
  %s6 = sld [smem:[#allocation0]]
  $region101: #{_run_kernel.1} parent=0
    _
  %s8 = ssub.s32 1, %s6
  %s9 = scalar_select 0, %s8, %s6
  %10 = sst [smem:[#allocation2]] %s0
  $region1: #{_run_kernel.1} parent=0
    #allocation3 [shape = 'u8[131072]{0}', space=vmem, size = 0x20000, scoped, tag = 'output window, operand 0']
    loop: start=0, step=1, limit=4
    $region2: #{_run_kernel.1} parent=1 // loop_pre_header
      _
    $region3: #{_run_kernel.1} parent=1 // loop_header
      %s12 = sphi 0, %s16
      %p13 = scmp.ge.s32.totalorder %s12, 4
      %s20 = sphi 0, %s20
      %s22 = sphi 0, %s20
      %s23 = sphi 0, %s22
      %s37 = sphi 0, %s23
      %s43 = sphi 0, %s45
      %s46 = sphi 0, %s43
      %s47 = sphi 0, %s46
      %s63 = sphi 0, %s47
      %s69 = sphi 0, %s71
      %s72 = sphi 0, %s69
      %s73 = sphi 0, %s72
      %s89 = sphi 0, %s73
      %s95 = sphi 0, %s97
      %s98 = sphi 0, %s95
      %s99 = sphi 0, %s98
      %s115 = sphi 0, %s99
      %s121 = sphi 0, %s123
      %s124 = sphi 0, %s121
      %s125 = sphi 0, %s124
      %s141 = sphi 0, %s125
    $region4: #{_run_kernel.1} parent=1 // loop_header_branch
      %15 = sbr.rel (%p13) target = $region8
    $region5: #{_run_kernel.1} parent=1 // loop_body
      %s17 = ssub.s32 %s12, 1
      %s18 = ssub.s32 %s12, 2
      %s19 = sadd.s32 %s12, 1
      %s21 = sadd.s32 %s20, 1
      %p24 = scmp.eq.s32.totalorder %s12, 1
      %p25 = scmp.ne.s32.totalorder %s20, %s22
      %p26 = scmp.eq.s32.totalorder %s12, 0
      %p27 = por %p25, %p26
      %p28 = scmp.ne.s32.totalorder %s20, %s22
      %p29 = scmp.eq.s32.totalorder %s17, 1
      %p30 = por %p28, %p29
      %p31 = scmp.ne.s32.totalorder %s22, %s23
      %p32 = scmp.eq.s32.totalorder %s17, 0
      %p33 = por %p31, %p32
      %p34 = scmp.ne.s32.totalorder %s22, %s23
      %p35 = scmp.eq.s32.totalorder %s18, 1
      %p36 = por %p34, %p35
      %p38 = scmp.ne.s32.totalorder %s23, %s37
      %p39 = scmp.eq.s32.totalorder %s18, 0
      %p40 = por %p38, %p39
      %s41 = ssub.s32 %s12, %s19
      %p42 = scmp.eq.s32.totalorder %s41, 0
      %s44 = sadd.s32 %s43, 1
      %s45 = scalar_select %p42, %s43, %s44
      %p48 = pneg %p42
      %p49 = scmp.eq.s32.totalorder %s12, 1
      %p50 = por %p48, %p49
      %p51 = scmp.ne.s32.totalorder %s43, %s46
      %p52 = scmp.eq.s32.totalorder %s12, 0
      %p53 = por %p51, %p52
      %p54 = scmp.ne.s32.totalorder %s43, %s46
      %p55 = scmp.eq.s32.totalorder %s17, 1
      %p56 = por %p54, %p55
      %p57 = scmp.ne.s32.totalorder %s46, %s47
      %p58 = scmp.eq.s32.totalorder %s17, 0
      %p59 = por %p57, %p58
      %p60 = scmp.ne.s32.totalorder %s46, %s47
      %p61 = scmp.eq.s32.totalorder %s18, 1
      %p62 = por %p60, %p61
      %p64 = scmp.ne.s32.totalorder %s47, %s63
      %p65 = scmp.eq.s32.totalorder %s18, 0
      %p66 = por %p64, %p65
      %s67 = ssub.s32 %s12, %s19
      %p68 = scmp.eq.s32.totalorder %s67, 0
      %s70 = sadd.s32 %s69, 1
      %s71 = scalar_select %p68, %s69, %s70
      %p74 = pneg %p68
      %p75 = scmp.eq.s32.totalorder %s12, 1
      %p76 = por %p74, %p75
      %p77 = scmp.ne.s32.totalorder %s69, %s72
      %p78 = scmp.eq.s32.totalorder %s12, 0
      %p79 = por %p77, %p78
      %p80 = scmp.ne.s32.totalorder %s69, %s72
      %p81 = scmp.eq.s32.totalorder %s17, 1
      %p82 = por %p80, %p81
      %p83 = scmp.ne.s32.totalorder %s72, %s73
      %p84 = scmp.eq.s32.totalorder %s17, 0
      %p85 = por %p83, %p84
      %p86 = scmp.ne.s32.totalorder %s72, %s73
      %p87 = scmp.eq.s32.totalorder %s18, 1
      %p88 = por %p86, %p87
      %p90 = scmp.ne.s32.totalorder %s73, %s89
      %p91 = scmp.eq.s32.totalorder %s18, 0
      %p92 = por %p90, %p91
      %s93 = ssub.s32 %s12, %s19
      %p94 = scmp.eq.s32.totalorder %s93, 0
      %s96 = sadd.s32 %s95, 1
      %s97 = scalar_select %p94, %s95, %s96
      %p100 = pneg %p94
      %p101 = scmp.eq.s32.totalorder %s12, 1
      %p102 = por %p100, %p101
      %p103 = scmp.ne.s32.totalorder %s95, %s98
      %p104 = scmp.eq.s32.totalorder %s12, 0
      %p105 = por %p103, %p104
      %p106 = scmp.ne.s32.totalorder %s95, %s98
      %p107 = scmp.eq.s32.totalorder %s17, 1
      %p108 = por %p106, %p107
      %p109 = scmp.ne.s32.totalorder %s98, %s99
      %p110 = scmp.eq.s32.totalorder %s17, 0
      %p111 = por %p109, %p110
      %p112 = scmp.ne.s32.totalorder %s98, %s99
      %p113 = scmp.eq.s32.totalorder %s18, 1
      %p114 = por %p112, %p113
      %p116 = scmp.ne.s32.totalorder %s99, %s115
      %p117 = scmp.eq.s32.totalorder %s18, 0
      %p118 = por %p116, %p117
      %s119 = ssub.s32 %s12, %s19
      %p120 = scmp.eq.s32.totalorder %s119, 0
      %s122 = sadd.s32 %s121, 1
      %s123 = scalar_select %p120, %s121, %s122
      %p126 = pneg %p120
      %p127 = scmp.eq.s32.totalorder %s12, 1
      %p128 = por %p126, %p127
      %p129 = scmp.ne.s32.totalorder %s121, %s124
      %p130 = scmp.eq.s32.totalorder %s12, 0
      %p131 = por %p129, %p130
      %p132 = scmp.ne.s32.totalorder %s121, %s124
      %p133 = scmp.eq.s32.totalorder %s17, 1
      %p134 = por %p132, %p133
      %p135 = scmp.ne.s32.totalorder %s124, %s125
      %p136 = scmp.eq.s32.totalorder %s17, 0
      %p137 = por %p135, %p136
      %p138 = scmp.ne.s32.totalorder %s124, %s125
      %p139 = scmp.eq.s32.totalorder %s18, 1
      %p140 = por %p138, %p139
      %p142 = scmp.ne.s32.totalorder %s125, %s141
      %p143 = scmp.eq.s32.totalorder %s18, 0
      %p144 = por %p142, %p143
      %p145 = scmp.le.s32.totalorder 1, %s12
      %p146 = scmp.lt.s32.totalorder %s12, 3
      %p147 = pnand %p145, %p146
      %p148 = pneg %p147
      // Predicated region
      $region9: #{_run_kernel.1} parent=5 // pred_check
        _
      $region10: #{_run_kernel.1} parent=5 // pred_check_branch
        %150 = sbr.rel (%p147) target = $region12
      $region11: #{_run_kernel.1} parent=5 // pred_region
        %s151 = ssub.s32 %s12, 1
        // Predicated region
        $region13: #{_run_kernel.1} parent=11 // pred_check
          %p152 = pneg %p33
        $region14: #{_run_kernel.1} parent=11 // pred_check_branch
          %154 = sbr.rel (%p152) target = $region16
        $region15: #{_run_kernel.1} parent=11 // pred_region
          _
        $region16: #{_run_kernel.1} parent=11 // pred_fallthru
          _
      $region12: #{_run_kernel.1} parent=5 // pred_fallthru
        _
      %p155 = scmp.lt.s32.totalorder %s12, 2
      // Predicated region
      $region17: #{_run_kernel.1} parent=5 // pred_check
        %p156 = pneg %p155
      $region18: #{_run_kernel.1} parent=5 // pred_check_branch
        %158 = sbr.rel (%p156) target = $region20
      $region19: #{_run_kernel.1} parent=5 // pred_region
        // Predicated region
        $region21: #{_run_kernel.1} parent=19 // pred_check
          %p159 = pneg %p53
        $region22: #{_run_kernel.1} parent=19 // pred_check_branch
          %161 = sbr.rel (%p159) target = $region24
        $region23: #{_run_kernel.1} parent=19 // pred_region
          %s162 = smul.u32 16, %s12
          %s163 = ssub.s32 25, %s162
          %p164 = scmp.lt.s32.totalorder %s163, 16
          %s165 = scalar_select %p164, %s163, 16
          %s166 = smul.u32 128, %s165
          %p167 = scmp.lt.s32.totalorder %s162, 24
          %s168 = scalar_select %p167, %s162, 24
          %s169 = smul.addr %s168, 8
          %s170 = scalar_lea.vmem %s1, %s169
          %s171 = smul.u32 16, %s12
          %s172 = ssub.s32 25, %s171
          %p173 = scmp.lt.s32.totalorder %s172, 16
          %s174 = scalar_select %p173, %s172, 16
          %s175 = smul.u32 128, %s174
        $region24: #{_run_kernel.1} parent=19 // pred_fallthru
          _
        // Predicated region
        $region25: #{_run_kernel.1} parent=19 // pred_check
          %p176 = pneg %p79
        $region26: #{_run_kernel.1} parent=19 // pred_check_branch
          %178 = sbr.rel (%p176) target = $region28
        $region27: #{_run_kernel.1} parent=19 // pred_region
          %s179 = smul.u32 16, %s12
          %s180 = ssub.s32 25, %s179
          %p181 = scmp.lt.s32.totalorder %s180, 16
          %s182 = scalar_select %p181, %s180, 16
          %s183 = smul.u32 128, %s182
          %p184 = scmp.lt.s32.totalorder %s179, 24
          %s185 = scalar_select %p184, %s179, 24
          %s186 = smul.addr %s185, 8
          %s187 = scalar_lea.vmem %s2, %s186
          %s188 = smul.u32 16, %s12
          %s189 = ssub.s32 25, %s188
          %p190 = scmp.lt.s32.totalorder %s189, 16
          %s191 = scalar_select %p190, %s189, 16
          %s192 = smul.u32 128, %s191
        $region28: #{_run_kernel.1} parent=19 // pred_fallthru
          _
      $region20: #{_run_kernel.1} parent=5 // pred_fallthru
        _
      %p193 = scmp.le.s32.totalorder 1, %s12
      %p194 = scmp.lt.s32.totalorder %s12, 3
      %p195 = pnand %p193, %p194
      %p196 = pneg %p195
      // Predicated region
      $region29: #{_run_kernel.1} parent=5 // pred_check
        _
      $region30: #{_run_kernel.1} parent=5 // pred_check_branch
        %198 = sbr.rel (%p195) target = $region32
      $region31: #{_run_kernel.1} parent=5 // pred_region
        %s199 = ssub.s32 %s12, 1
        %p200 = pneg %p33
        %p201 = pneg %p30
        %s202 = smul.u32 16, %s17
        %s203 = ssub.s32 25, %s202
        %p204 = scmp.lt.s32.totalorder %s203, 16
        %s205 = scalar_select %p204, %s203, 16
        %s206 = smul.u32 128, %s205
        %p207 = scmp.lt.s32.totalorder %s202, 24
        %s208 = scalar_select %p207, %s202, 24
        %s209 = smul.addr %s208, 8
        %s210 = scalar_lea.vmem %s1, %s209
        %p211 = pneg %p59
        %p212 = pneg %p56
        %s213 = smul.u32 16, %s17
        %s214 = ssub.s32 25, %s213
        %p215 = scmp.lt.s32.totalorder %s214, 16
        %s216 = scalar_select %p215, %s214, 16
        %s217 = smul.u32 128, %s216
        %p218 = scmp.lt.s32.totalorder %s213, 24
        %s219 = scalar_select %p218, %s213, 24
        %s220 = smul.addr %s219, 8
        %s221 = scalar_lea.vmem %s2, %s220
        %p222 = pneg %p85
        %p223 = pneg %p82
        %p224 = pneg %p111
        %p225 = pneg %p108
        %s226 = sand.u32 %s98, 1
        %s227 = sand.u32 %s98, 1
        %s228 = smul.addr %s227, 128
        %s229 = scalar_lea.vmem [#allocation3], %s228
        %p230 = pneg %p137
        %p231 = pneg %p134
        %p232 = scmp.lt.s32.totalorder %s17, 1
        %s233 = scalar_select %p232, %s17, 1
        %s234 = smul.addr %s233, 4
        %s235 = scalar_lea.vmem %s4, %s234
        %s236 = smul.u32 16, %s17
        %s237 = ssub.s32 25, %s236
        %p238 = scmp.lt.s32.totalorder %s237, 16
        %s239 = scalar_select %p238, %s237, 16
        %s240 = smul.u32 128, %s239
        %p241 = scmp.lt.s32.totalorder %s236, 24
        %s242 = scalar_select %p241, %s236, 24
        %s243 = smul.addr %s242, 8
        %s244 = scalar_lea.vmem %s1, %s243
        %s245 = smul.u32 16, %s17
        %s246 = ssub.s32 25, %s245
        %p247 = scmp.lt.s32.totalorder %s246, 16
        %s248 = scalar_select %p247, %s246, 16
        %s249 = smul.u32 128, %s248
        %s250 = smul.u32 16, %s17
        %s251 = ssub.s32 25, %s250
        %p252 = scmp.lt.s32.totalorder %s251, 16
        %s253 = scalar_select %p252, %s251, 16
        %s254 = smul.u32 128, %s253
        %p255 = scmp.lt.s32.totalorder %s250, 24
        %s256 = scalar_select %p255, %s250, 24
        %s257 = smul.addr %s256, 8
        %s258 = scalar_lea.vmem %s2, %s257
        %s259 = smul.u32 16, %s17
        %s260 = ssub.s32 25, %s259
        %p261 = scmp.lt.s32.totalorder %s260, 16
        %s262 = scalar_select %p261, %s260, 16
        %s263 = smul.u32 128, %s262
        %s264 = smul.u32 16, %s17
        %s265 = ssub.s32 25, %s264
        %p266 = scmp.lt.s32.totalorder %s265, 16
        %s267 = scalar_select %p266, %s265, 16
        %s268 = smul.u32 128, %s267
        %p269 = scmp.lt.s32.totalorder %s17, 1
        %s270 = scalar_select %p269, %s17, 1
        %s271 = smul.addr %s270, 4
        %s272 = scalar_lea.vmem %s4, %s271
        %v273 = vld [vmem:[%s244] sm:$0xff]
        %v274 = vld [vmem:[%s244 + $0x8] sm:$0xff]
        %v275 = vld [vmem:[%s244 + $0x10] sm:$0xff]
        %v276 = vld [vmem:[%s244 + $0x18] sm:$0xff]
        %v277 = vld [vmem:[%s244 + $0x20] sm:$0xff]
        %v278 = vld [vmem:[%s244 + $0x28] sm:$0xff]
        %v279 = vld [vmem:[%s244 + $0x30] sm:$0xff]
        %v280 = vld [vmem:[%s244 + $0x38] sm:$0xff]
        %v281 = vld [vmem:[%s244 + $0x40] sm:$0xff]
        %v282 = vld [vmem:[%s244 + $0x48] sm:$0xff]
        %v283 = vld [vmem:[%s244 + $0x50] sm:$0xff]
        %v284 = vld [vmem:[%s244 + $0x58] sm:$0xff]
        %v285 = vld [vmem:[%s244 + $0x60] sm:$0xff]
        %v286 = vld [vmem:[%s244 + $0x68] sm:$0xff]
        %v287 = vld [vmem:[%s244 + $0x70] sm:$0xff]
        %v288 = vld [vmem:[%s244 + $0x78] sm:$0xff]
        %s289 = sld [smem:[#allocation2]]
        %v290 = vstv %s289
        %v291 = vrcp.pop %v290
        %s292 = vtos %v291
        %vm293 = vcmask 130048
        %v294 = vsel %vm293, %v273, -inf
        %295 = vmax.xlane.f32.xlu0 %v294
        %v296 = vpop.xlane.xlu0 %295
        %v297 = vsel %vm293, %v274, -inf
        %298 = vmax.xlane.f32.xlu0 %v297
        %v299 = vpop.xlane.xlu0 %298
        %v300 = vsel %vm293, %v275, -inf
        %301 = vmax.xlane.f32.xlu0 %v300
        %v302 = vpop.xlane.xlu0 %301
        %v303 = vsel %vm293, %v276, -inf
        %304 = vmax.xlane.f32.xlu0 %v303
        %v305 = vpop.xlane.xlu0 %304
        %v306 = vsel %vm293, %v277, -inf
        %307 = vmax.xlane.f32.xlu0 %v306
        %v308 = vpop.xlane.xlu0 %307
        %v309 = vsel %vm293, %v278, -inf
        %310 = vmax.xlane.f32.xlu0 %v309
        %v311 = vpop.xlane.xlu0 %310
        %v312 = vsel %vm293, %v279, -inf
        %313 = vmax.xlane.f32.xlu0 %v312
        %v314 = vpop.xlane.xlu0 %313
        %v315 = vsel %vm293, %v280, -inf
        %316 = vmax.xlane.f32.xlu0 %v315
        %v317 = vpop.xlane.xlu0 %316
        %v318 = vsel %vm293, %v281, -inf
        %319 = vmax.xlane.f32.xlu0 %v318
        %v320 = vpop.xlane.xlu0 %319
        %v321 = vsel %vm293, %v282, -inf
        %322 = vmax.xlane.f32.xlu0 %v321
        %v323 = vpop.xlane.xlu0 %322
        %v324 = vsel %vm293, %v283, -inf
        %325 = vmax.xlane.f32.xlu0 %v324
        %v326 = vpop.xlane.xlu0 %325
        %v327 = vsel %vm293, %v284, -inf
        %328 = vmax.xlane.f32.xlu0 %v327
        %v329 = vpop.xlane.xlu0 %328
        %v330 = vsel %vm293, %v285, -inf
        %331 = vmax.xlane.f32.xlu0 %v330
        %v332 = vpop.xlane.xlu0 %331
        %v333 = vsel %vm293, %v286, -inf
        %334 = vmax.xlane.f32.xlu0 %v333
        %v335 = vpop.xlane.xlu0 %334
        %v336 = vsel %vm293, %v287, -inf
        %337 = vmax.xlane.f32.xlu0 %v336
        %v338 = vpop.xlane.xlu0 %337
        %v339 = vsel %vm293, %v288, -inf
        %340 = vmax.xlane.f32.xlu0 %v339
        %v341 = vpop.xlane.xlu0 %340
        %v342 = vsub.f32 %v273, %v296
        %v343 = vsub.f32 %v274, %v299
        %v344 = vsub.f32 %v275, %v302
        %v345 = vsub.f32 %v276, %v305
        %v346 = vsub.f32 %v277, %v308
        %v347 = vsub.f32 %v278, %v311
        %v348 = vsub.f32 %v279, %v314
        %v349 = vsub.f32 %v280, %v317
        %v350 = vsub.f32 %v281, %v320
        %v351 = vsub.f32 %v282, %v323
        %v352 = vsub.f32 %v283, %v326
        %v353 = vsub.f32 %v284, %v329
        %v354 = vsub.f32 %v285, %v332
        %v355 = vsub.f32 %v286, %v335
        %v356 = vsub.f32 %v287, %v338
        %v357 = vsub.f32 %v288, %v341
        %v358 = vstv %s292
        %v359 = vmul.f32 %v342, %v358
        %v360 = vmul.f32 %v343, %v358
        %v361 = vmul.f32 %v344, %v358
        %v362 = vmul.f32 %v345, %v358
        %v363 = vmul.f32 %v346, %v358
        %v364 = vmul.f32 %v347, %v358
        %v365 = vmul.f32 %v348, %v358
        %v366 = vmul.f32 %v349, %v358
        %v367 = vmul.f32 %v350, %v358
        %v368 = vmul.f32 %v351, %v358
        %v369 = vmul.f32 %v352, %v358
        %v370 = vmul.f32 %v353, %v358
        %v371 = vmul.f32 %v354, %v358
        %v372 = vmul.f32 %v355, %v358
        %v373 = vmul.f32 %v356, %v358
        %v374 = vmul.f32 %v357, %v358
        %v375 = vmul.f32 %v359, 1.442695
        %v376 = vpow.pop %v375
        %v377 = vmul.f32 %v360, 1.442695
        %v378 = vpow.pop %v377
        %v379 = vmul.f32 %v361, 1.442695
        %v380 = vpow.pop %v379
        %v381 = vmul.f32 %v362, 1.442695
        %v382 = vpow.pop %v381
        %v383 = vmul.f32 %v363, 1.442695
        %v384 = vpow.pop %v383
        %v385 = vmul.f32 %v364, 1.442695
        %v386 = vpow.pop %v385
        %v387 = vmul.f32 %v365, 1.442695
        %v388 = vpow.pop %v387
        %v389 = vmul.f32 %v366, 1.442695
        %v390 = vpow.pop %v389
        %v391 = vmul.f32 %v367, 1.442695
        %v392 = vpow.pop %v391
        %v393 = vmul.f32 %v368, 1.442695
        %v394 = vpow.pop %v393
        %v395 = vmul.f32 %v369, 1.442695
        %v396 = vpow.pop %v395
        %v397 = vmul.f32 %v370, 1.442695
        %v398 = vpow.pop %v397
        %v399 = vmul.f32 %v371, 1.442695
        %v400 = vpow.pop %v399
        %v401 = vmul.f32 %v372, 1.442695
        %v402 = vpow.pop %v401
        %v403 = vmul.f32 %v373, 1.442695
        %v404 = vpow.pop %v403
        %v405 = vmul.f32 %v374, 1.442695
        %v406 = vpow.pop %v405
        %v407 = vsel %vm293, %v376, 0.0
        %408 = vadd.xlane.f32.xlu0 %v407
        %v409 = vpop.xlane.xlu0 %408
        %v410 = vsel %vm293, %v378, 0.0
        %411 = vadd.xlane.f32.xlu0 %v410
        %v412 = vpop.xlane.xlu0 %411
        %v413 = vsel %vm293, %v380, 0.0
        %414 = vadd.xlane.f32.xlu0 %v413
        %v415 = vpop.xlane.xlu0 %414
        %v416 = vsel %vm293, %v382, 0.0
        %417 = vadd.xlane.f32.xlu0 %v416
        %v418 = vpop.xlane.xlu0 %417
        %v419 = vsel %vm293, %v384, 0.0
        %420 = vadd.xlane.f32.xlu0 %v419
        %v421 = vpop.xlane.xlu0 %420
        %v422 = vsel %vm293, %v386, 0.0
        %423 = vadd.xlane.f32.xlu0 %v422
        %v424 = vpop.xlane.xlu0 %423
        %v425 = vsel %vm293, %v388, 0.0
        %426 = vadd.xlane.f32.xlu0 %v425
        %v427 = vpop.xlane.xlu0 %426
        %v428 = vsel %vm293, %v390, 0.0
        %429 = vadd.xlane.f32.xlu0 %v428
        %v430 = vpop.xlane.xlu0 %429
        %v431 = vsel %vm293, %v392, 0.0
        %432 = vadd.xlane.f32.xlu0 %v431
        %v433 = vpop.xlane.xlu0 %432
        %v434 = vsel %vm293, %v394, 0.0
        %435 = vadd.xlane.f32.xlu0 %v434
        %v436 = vpop.xlane.xlu0 %435
        %v437 = vsel %vm293, %v396, 0.0
        %438 = vadd.xlane.f32.xlu0 %v437
        %v439 = vpop.xlane.xlu0 %438
        %v440 = vsel %vm293, %v398, 0.0
        %441 = vadd.xlane.f32.xlu0 %v440
        %v442 = vpop.xlane.xlu0 %441
        %v443 = vsel %vm293, %v400, 0.0
        %444 = vadd.xlane.f32.xlu0 %v443
        %v445 = vpop.xlane.xlu0 %444
        %v446 = vsel %vm293, %v402, 0.0
        %447 = vadd.xlane.f32.xlu0 %v446
        %v448 = vpop.xlane.xlu0 %447
        %v449 = vsel %vm293, %v404, 0.0
        %450 = vadd.xlane.f32.xlu0 %v449
        %v451 = vpop.xlane.xlu0 %450
        %v452 = vsel %vm293, %v406, 0.0
        %453 = vadd.xlane.f32.xlu0 %v452
        %v454 = vpop.xlane.xlu0 %453
        %v455 = vrcp.pop %v409
        %v456 = vmul.f32 1.0, %v455
        %v457 = vrcp.pop %v412
        %v458 = vmul.f32 1.0, %v457
        %v459 = vrcp.pop %v415
        %v460 = vmul.f32 1.0, %v459
        %v461 = vrcp.pop %v418
        %v462 = vmul.f32 1.0, %v461
        %v463 = vrcp.pop %v421
        %v464 = vmul.f32 1.0, %v463
        %v465 = vrcp.pop %v424
        %v466 = vmul.f32 1.0, %v465
        %v467 = vrcp.pop %v427
        %v468 = vmul.f32 1.0, %v467
        %v469 = vrcp.pop %v430
        %v470 = vmul.f32 1.0, %v469
        %v471 = vrcp.pop %v433
        %v472 = vmul.f32 1.0, %v471
        %v473 = vrcp.pop %v436
        %v474 = vmul.f32 1.0, %v473
        %v475 = vrcp.pop %v439
        %v476 = vmul.f32 1.0, %v475
        %v477 = vrcp.pop %v442
        %v478 = vmul.f32 1.0, %v477
        %v479 = vrcp.pop %v445
        %v480 = vmul.f32 1.0, %v479
        %v481 = vrcp.pop %v448
        %v482 = vmul.f32 1.0, %v481
        %v483 = vrcp.pop %v451
        %v484 = vmul.f32 1.0, %v483
        %v485 = vrcp.pop %v454
        %v486 = vmul.f32 1.0, %v485
        %v487 = vlaneseq
        %v488 = vand.u32 %v487, 127
        %vm489 = vcmp.eq.f32.partialorder %v273, %v296
        %vm490 = vcmp.eq.f32.partialorder %v274, %v299
        %vm491 = vcmp.eq.f32.partialorder %v275, %v302
        %vm492 = vcmp.eq.f32.partialorder %v276, %v305
        %vm493 = vcmp.eq.f32.partialorder %v277, %v308
        %vm494 = vcmp.eq.f32.partialorder %v278, %v311
        %vm495 = vcmp.eq.f32.partialorder %v279, %v314
        %vm496 = vcmp.eq.f32.partialorder %v280, %v317
        %vm497 = vcmp.eq.f32.partialorder %v281, %v320
        %vm498 = vcmp.eq.f32.partialorder %v282, %v323
        %vm499 = vcmp.eq.f32.partialorder %v283, %v326
        %vm500 = vcmp.eq.f32.partialorder %v284, %v329
        %vm501 = vcmp.eq.f32.partialorder %v285, %v332
        %vm502 = vcmp.eq.f32.partialorder %v286, %v335
        %vm503 = vcmp.eq.f32.partialorder %v287, %v338
        %vm504 = vcmp.eq.f32.partialorder %v288, %v341
        %v505 = vsel %vm489, %v488, 16
        %v506 = vsel %vm490, %v488, 16
        %v507 = vsel %vm491, %v488, 16
        %v508 = vsel %vm492, %v488, 16
        %v509 = vsel %vm493, %v488, 16
        %v510 = vsel %vm494, %v488, 16
        %v511 = vsel %vm495, %v488, 16
        %v512 = vsel %vm496, %v488, 16
        %v513 = vsel %vm497, %v488, 16
        %v514 = vsel %vm498, %v488, 16
        %v515 = vsel %vm499, %v488, 16
        %v516 = vsel %vm500, %v488, 16
        %v517 = vsel %vm501, %v488, 16
        %v518 = vsel %vm502, %v488, 16
        %v519 = vsel %vm503, %v488, 16
        %v520 = vsel %vm504, %v488, 16
        %v521 = vsel %vm293, %v505, 2147483647
        %v522 = vand.u32 %v521, 65535
        %v523 = vshra.s32 %v521, 16
        %v524 = vcvt.s32.f32 %v522
        %v525 = vcvt.s32.f32 %v523
        %526 = vmin.xlane.f32.xlu0 %v525
        %v527 = vpop.xlane.xlu0 %526
        %vm528 = vcmp.eq.f32.partialorder %v525, %v527
        %v529 = vsel %vm528, %v524, inf
        %530 = vmin.xlane.f32.xlu0 %v529
        %v531 = vpop.xlane.xlu0 %530
        %v532 = vcvt.f32.s32 %v531
        %v533 = vcvt.f32.s32 %v527
        %v534 = vshll.u32 %v533, 16
        %v535 = vadd.s32 %v534, %v532
        %v536 = vsel %vm293, %v506, 2147483647
        %v537 = vand.u32 %v536, 65535
        %v538 = vshra.s32 %v536, 16
        %v539 = vcvt.s32.f32 %v537
        %v540 = vcvt.s32.f32 %v538
        %541 = vmin.xlane.f32.xlu0 %v540
        %v542 = vpop.xlane.xlu0 %541
        %vm543 = vcmp.eq.f32.partialorder %v540, %v542
        %v544 = vsel %vm543, %v539, inf
        %545 = vmin.xlane.f32.xlu0 %v544
        %v546 = vpop.xlane.xlu0 %545
        %v547 = vcvt.f32.s32 %v546
        %v548 = vcvt.f32.s32 %v542
        %v549 = vshll.u32 %v548, 16
        %v550 = vadd.s32 %v549, %v547
        %v551 = vsel %vm293, %v507, 2147483647
        %v552 = vand.u32 %v551, 65535
        %v553 = vshra.s32 %v551, 16
        %v554 = vcvt.s32.f32 %v552
        %v555 = vcvt.s32.f32 %v553
        %556 = vmin.xlane.f32.xlu0 %v555
        %v557 = vpop.xlane.xlu0 %556
        %vm558 = vcmp.eq.f32.partialorder %v555, %v557
        %v559 = vsel %vm558, %v554, inf
        %560 = vmin.xlane.f32.xlu0 %v559
        %v561 = vpop.xlane.xlu0 %560
        %v562 = vcvt.f32.s32 %v561
        %v563 = vcvt.f32.s32 %v557
        %v564 = vshll.u32 %v563, 16
        %v565 = vadd.s32 %v564, %v562
        %v566 = vsel %vm293, %v508, 2147483647
        %v567 = vand.u32 %v566, 65535
        %v568 = vshra.s32 %v566, 16
        %v569 = vcvt.s32.f32 %v567
        %v570 = vcvt.s32.f32 %v568
        %571 = vmin.xlane.f32.xlu0 %v570
        %v572 = vpop.xlane.xlu0 %571
        %vm573 = vcmp.eq.f32.partialorder %v570, %v572
        %v574 = vsel %vm573, %v569, inf
        %575 = vmin.xlane.f32.xlu0 %v574
        %v576 = vpop.xlane.xlu0 %575
        %v577 = vcvt.f32.s32 %v576
        %v578 = vcvt.f32.s32 %v572
        %v579 = vshll.u32 %v578, 16
        %v580 = vadd.s32 %v579, %v577
        %v581 = vsel %vm293, %v509, 2147483647
        %v582 = vand.u32 %v581, 65535
        %v583 = vshra.s32 %v581, 16
        %v584 = vcvt.s32.f32 %v582
        %v585 = vcvt.s32.f32 %v583
        %586 = vmin.xlane.f32.xlu0 %v585
        %v587 = vpop.xlane.xlu0 %586
        %vm588 = vcmp.eq.f32.partialorder %v585, %v587
        %v589 = vsel %vm588, %v584, inf
        %590 = vmin.xlane.f32.xlu0 %v589
        %v591 = vpop.xlane.xlu0 %590
        %v592 = vcvt.f32.s32 %v591
        %v593 = vcvt.f32.s32 %v587
        %v594 = vshll.u32 %v593, 16
        %v595 = vadd.s32 %v594, %v592
        %v596 = vsel %vm293, %v510, 2147483647
        %v597 = vand.u32 %v596, 65535
        %v598 = vshra.s32 %v596, 16
        %v599 = vcvt.s32.f32 %v597
        %v600 = vcvt.s32.f32 %v598
        %601 = vmin.xlane.f32.xlu0 %v600
        %v602 = vpop.xlane.xlu0 %601
        %vm603 = vcmp.eq.f32.partialorder %v600, %v602
        %v604 = vsel %vm603, %v599, inf
        %605 = vmin.xlane.f32.xlu0 %v604
        %v606 = vpop.xlane.xlu0 %605
        %v607 = vcvt.f32.s32 %v606
        %v608 = vcvt.f32.s32 %v602
        %v609 = vshll.u32 %v608, 16
        %v610 = vadd.s32 %v609, %v607
        %v611 = vsel %vm293, %v511, 2147483647
        %v612 = vand.u32 %v611, 65535
        %v613 = vshra.s32 %v611, 16
        %v614 = vcvt.s32.f32 %v612
        %v615 = vcvt.s32.f32 %v613
        %616 = vmin.xlane.f32.xlu0 %v615
        %v617 = vpop.xlane.xlu0 %616
        %vm618 = vcmp.eq.f32.partialorder %v615, %v617
        %v619 = vsel %vm618, %v614, inf
        %620 = vmin.xlane.f32.xlu0 %v619
        %v621 = vpop.xlane.xlu0 %620
        %v622 = vcvt.f32.s32 %v621
        %v623 = vcvt.f32.s32 %v617
        %v624 = vshll.u32 %v623, 16
        %v625 = vadd.s32 %v624, %v622
        %v626 = vsel %vm293, %v512, 2147483647
        %v627 = vand.u32 %v626, 65535
        %v628 = vshra.s32 %v626, 16
        %v629 = vcvt.s32.f32 %v627
        %v630 = vcvt.s32.f32 %v628
        %631 = vmin.xlane.f32.xlu0 %v630
        %v632 = vpop.xlane.xlu0 %631
        %vm633 = vcmp.eq.f32.partialorder %v630, %v632
        %v634 = vsel %vm633, %v629, inf
        %635 = vmin.xlane.f32.xlu0 %v634
        %v636 = vpop.xlane.xlu0 %635
        %v637 = vcvt.f32.s32 %v636
        %v638 = vcvt.f32.s32 %v632
        %v639 = vshll.u32 %v638, 16
        %v640 = vadd.s32 %v639, %v637
        %v641 = vsel %vm293, %v513, 2147483647
        %v642 = vand.u32 %v641, 65535
        %v643 = vshra.s32 %v641, 16
        %v644 = vcvt.s32.f32 %v642
        %v645 = vcvt.s32.f32 %v643
        %646 = vmin.xlane.f32.xlu0 %v645
        %v647 = vpop.xlane.xlu0 %646
        %vm648 = vcmp.eq.f32.partialorder %v645, %v647
        %v649 = vsel %vm648, %v644, inf
        %650 = vmin.xlane.f32.xlu0 %v649
        %v651 = vpop.xlane.xlu0 %650
        %v652 = vcvt.f32.s32 %v651
        %v653 = vcvt.f32.s32 %v647
        %v654 = vshll.u32 %v653, 16
        %v655 = vadd.s32 %v654, %v652
        %v656 = vsel %vm293, %v514, 2147483647
        %v657 = vand.u32 %v656, 65535
        %v658 = vshra.s32 %v656, 16
        %v659 = vcvt.s32.f32 %v657
        %v660 = vcvt.s32.f32 %v658
        %661 = vmin.xlane.f32.xlu0 %v660
        %v662 = vpop.xlane.xlu0 %661
        %vm663 = vcmp.eq.f32.partialorder %v660, %v662
        %v664 = vsel %vm663, %v659, inf
        %665 = vmin.xlane.f32.xlu0 %v664
        %v666 = vpop.xlane.xlu0 %665
        %v667 = vcvt.f32.s32 %v666
        %v668 = vcvt.f32.s32 %v662
        %v669 = vshll.u32 %v668, 16
        %v670 = vadd.s32 %v669, %v667
        %v671 = vsel %vm293, %v515, 2147483647
        %v672 = vand.u32 %v671, 65535
        %v673 = vshra.s32 %v671, 16
        %v674 = vcvt.s32.f32 %v672
        %v675 = vcvt.s32.f32 %v673
        %676 = vmin.xlane.f32.xlu0 %v675
        %v677 = vpop.xlane.xlu0 %676
        %vm678 = vcmp.eq.f32.partialorder %v675, %v677
        %v679 = vsel %vm678, %v674, inf
        %680 = vmin.xlane.f32.xlu0 %v679
        %v681 = vpop.xlane.xlu0 %680
        %v682 = vcvt.f32.s32 %v681
        %v683 = vcvt.f32.s32 %v677
        %v684 = vshll.u32 %v683, 16
        %v685 = vadd.s32 %v684, %v682
        %v686 = vsel %vm293, %v516, 2147483647
        %v687 = vand.u32 %v686, 65535
        %v688 = vshra.s32 %v686, 16
        %v689 = vcvt.s32.f32 %v687
        %v690 = vcvt.s32.f32 %v688
        %691 = vmin.xlane.f32.xlu0 %v690
        %v692 = vpop.xlane.xlu0 %691
        %vm693 = vcmp.eq.f32.partialorder %v690, %v692
        %v694 = vsel %vm693, %v689, inf
        %695 = vmin.xlane.f32.xlu0 %v694
        %v696 = vpop.xlane.xlu0 %695
        %v697 = vcvt.f32.s32 %v696
        %v698 = vcvt.f32.s32 %v692
        %v699 = vshll.u32 %v698, 16
        %v700 = vadd.s32 %v699, %v697
        %v701 = vsel %vm293, %v517, 2147483647
        %v702 = vand.u32 %v701, 65535
        %v703 = vshra.s32 %v701, 16
        %v704 = vcvt.s32.f32 %v702
        %v705 = vcvt.s32.f32 %v703
        %706 = vmin.xlane.f32.xlu0 %v705
        %v707 = vpop.xlane.xlu0 %706
        %vm708 = vcmp.eq.f32.partialorder %v705, %v707
        %v709 = vsel %vm708, %v704, inf
        %710 = vmin.xlane.f32.xlu0 %v709
        %v711 = vpop.xlane.xlu0 %710
        %v712 = vcvt.f32.s32 %v711
        %v713 = vcvt.f32.s32 %v707
        %v714 = vshll.u32 %v713, 16
        %v715 = vadd.s32 %v714, %v712
        %v716 = vsel %vm293, %v518, 2147483647
        %v717 = vand.u32 %v716, 65535
        %v718 = vshra.s32 %v716, 16
        %v719 = vcvt.s32.f32 %v717
        %v720 = vcvt.s32.f32 %v718
        %721 = vmin.xlane.f32.xlu0 %v720
        %v722 = vpop.xlane.xlu0 %721
        %vm723 = vcmp.eq.f32.partialorder %v720, %v722
        %v724 = vsel %vm723, %v719, inf
        %725 = vmin.xlane.f32.xlu0 %v724
        %v726 = vpop.xlane.xlu0 %725
        %v727 = vcvt.f32.s32 %v726
        %v728 = vcvt.f32.s32 %v722
        %v729 = vshll.u32 %v728, 16
        %v730 = vadd.s32 %v729, %v727
        %v731 = vsel %vm293, %v519, 2147483647
        %v732 = vand.u32 %v731, 65535
        %v733 = vshra.s32 %v731, 16
        %v734 = vcvt.s32.f32 %v732
        %v735 = vcvt.s32.f32 %v733
        %736 = vmin.xlane.f32.xlu0 %v735
        %v737 = vpop.xlane.xlu0 %736
        %vm738 = vcmp.eq.f32.partialorder %v735, %v737
        %v739 = vsel %vm738, %v734, inf
        %740 = vmin.xlane.f32.xlu0 %v739
        %v741 = vpop.xlane.xlu0 %740
        %v742 = vcvt.f32.s32 %v741
        %v743 = vcvt.f32.s32 %v737
        %v744 = vshll.u32 %v743, 16
        %v745 = vadd.s32 %v744, %v742
        %v746 = vsel %vm293, %v520, 2147483647
        %v747 = vand.u32 %v746, 65535
        %v748 = vshra.s32 %v746, 16
        %v749 = vcvt.s32.f32 %v747
        %v750 = vcvt.s32.f32 %v748
        %751 = vmin.xlane.f32.xlu0 %v750
        %v752 = vpop.xlane.xlu0 %751
        %vm753 = vcmp.eq.f32.partialorder %v750, %v752
        %v754 = vsel %vm753, %v749, inf
        %755 = vmin.xlane.f32.xlu0 %v754
        %v756 = vpop.xlane.xlu0 %755
        %v757 = vcvt.f32.s32 %v756
        %v758 = vcvt.f32.s32 %v752
        %v759 = vshll.u32 %v758, 16
        %v760 = vadd.s32 %v759, %v757
        %v761 = vld [vmem:[%s258] sm:$0xff]
        %v762 = vld [vmem:[%s258 + $0x8] sm:$0xff]
        %v763 = vld [vmem:[%s258 + $0x10] sm:$0xff]
        %v764 = vld [vmem:[%s258 + $0x18] sm:$0xff]
        %v765 = vld [vmem:[%s258 + $0x20] sm:$0xff]
        %v766 = vld [vmem:[%s258 + $0x28] sm:$0xff]
        %v767 = vld [vmem:[%s258 + $0x30] sm:$0xff]
        %v768 = vld [vmem:[%s258 + $0x38] sm:$0xff]
        %v769 = vld [vmem:[%s258 + $0x40] sm:$0xff]
        %v770 = vld [vmem:[%s258 + $0x48] sm:$0xff]
        %v771 = vld [vmem:[%s258 + $0x50] sm:$0xff]
        %v772 = vld [vmem:[%s258 + $0x58] sm:$0xff]
        %v773 = vld [vmem:[%s258 + $0x60] sm:$0xff]
        %v774 = vld [vmem:[%s258 + $0x68] sm:$0xff]
        %v775 = vld [vmem:[%s258 + $0x70] sm:$0xff]
        %v776 = vld [vmem:[%s258 + $0x78] sm:$0xff]
        %vm777 = vcmp.eq.s32.totalorder %v535, %v761
        %vm778 = vcmp.eq.s32.totalorder %v550, %v762
        %vm779 = vcmp.eq.s32.totalorder %v565, %v763
        %vm780 = vcmp.eq.s32.totalorder %v580, %v764
        %vm781 = vcmp.eq.s32.totalorder %v595, %v765
        %vm782 = vcmp.eq.s32.totalorder %v610, %v766
        %vm783 = vcmp.eq.s32.totalorder %v625, %v767
        %vm784 = vcmp.eq.s32.totalorder %v640, %v768
        %vm785 = vcmp.eq.s32.totalorder %v655, %v769
        %vm786 = vcmp.eq.s32.totalorder %v670, %v770
        %vm787 = vcmp.eq.s32.totalorder %v685, %v771
        %vm788 = vcmp.eq.s32.totalorder %v700, %v772
        %vm789 = vcmp.eq.s32.totalorder %v715, %v773
        %vm790 = vcmp.eq.s32.totalorder %v730, %v774
        %vm791 = vcmp.eq.s32.totalorder %v745, %v775
        %vm792 = vcmp.eq.s32.totalorder %v760, %v776
        %v793 = vsel %vm777, 1, 0
        %v794 = vsel %vm778, 1, 0
        %v795 = vsel %vm779, 1, 0
        %v796 = vsel %vm780, 1, 0
        %v797 = vsel %vm781, 1, 0
        %v798 = vsel %vm782, 1, 0
        %v799 = vsel %vm783, 1, 0
        %v800 = vsel %vm784, 1, 0
        %v801 = vsel %vm785, 1, 0
        %v802 = vsel %vm786, 1, 0
        %v803 = vsel %vm787, 1, 0
        %v804 = vsel %vm788, 1, 0
        %v805 = vsel %vm789, 1, 0
        %v806 = vsel %vm790, 1, 0
        %v807 = vsel %vm791, 1, 0
        %v808 = vsel %vm792, 1, 0
        %v809 = vcvt.s32.f32 %v793
        %v810 = vcvt.s32.f32 %v794
        %v811 = vcvt.s32.f32 %v795
        %v812 = vcvt.s32.f32 %v796
        %v813 = vcvt.s32.f32 %v797
        %v814 = vcvt.s32.f32 %v798
        %v815 = vcvt.s32.f32 %v799
        %v816 = vcvt.s32.f32 %v800
        %v817 = vcvt.s32.f32 %v801
        %v818 = vcvt.s32.f32 %v802
        %v819 = vcvt.s32.f32 %v803
        %v820 = vcvt.s32.f32 %v804
        %v821 = vcvt.s32.f32 %v805
        %v822 = vcvt.s32.f32 %v806
        %v823 = vcvt.s32.f32 %v807
        %v824 = vcvt.s32.f32 %v808
        %v825 = vlaneseq
        %v826 = vshrl.u32 %v825, 7
        %v827 = vadd.s32 %v826, 8
        %v828 = vadd.s32 %v826, 16
        %v829 = vadd.s32 %v826, 24
        %v830 = vadd.s32 %v826, 32
        %v831 = vadd.s32 %v826, 40
        %v832 = vadd.s32 %v826, 48
        %v833 = vadd.s32 %v826, 56
        %v834 = vadd.s32 %v826, 64
        %v835 = vadd.s32 %v826, 72
        %v836 = vadd.s32 %v826, 80
        %v837 = vadd.s32 %v826, 88
        %v838 = vadd.s32 %v826, 96
        %v839 = vadd.s32 %v826, 104
        %v840 = vadd.s32 %v826, 112
        %v841 = vadd.s32 %v826, 120
        %s842 = smul.u32 %s17, 128
        %v843 = vstv %s842
        %v844 = vadd.s32 %v826, %v843
        %v845 = vadd.s32 %v827, %v843
        %v846 = vadd.s32 %v828, %v843
        %v847 = vadd.s32 %v829, %v843
        %v848 = vadd.s32 %v830, %v843
        %v849 = vadd.s32 %v831, %v843
        %v850 = vadd.s32 %v832, %v843
        %v851 = vadd.s32 %v833, %v843
        %v852 = vadd.s32 %v834, %v843
        %v853 = vadd.s32 %v835, %v843
        %v854 = vadd.s32 %v836, %v843
        %v855 = vadd.s32 %v837, %v843
        %v856 = vadd.s32 %v838, %v843
        %v857 = vadd.s32 %v839, %v843
        %v858 = vadd.s32 %v840, %v843
        %v859 = vadd.s32 %v841, %v843
        %vm860 = vcmp.lt.s32.totalorder %v844, 200
        %vm861 = vcmp.lt.s32.totalorder %v845, 200
        %vm862 = vcmp.lt.s32.totalorder %v846, 200
        %vm863 = vcmp.lt.s32.totalorder %v847, 200
        %vm864 = vcmp.lt.s32.totalorder %v848, 200
        %vm865 = vcmp.lt.s32.totalorder %v849, 200
        %vm866 = vcmp.lt.s32.totalorder %v850, 200
        %vm867 = vcmp.lt.s32.totalorder %v851, 200
        %vm868 = vcmp.lt.s32.totalorder %v852, 200
        %vm869 = vcmp.lt.s32.totalorder %v853, 200
        %vm870 = vcmp.lt.s32.totalorder %v854, 200
        %vm871 = vcmp.lt.s32.totalorder %v855, 200
        %vm872 = vcmp.lt.s32.totalorder %v856, 200
        %vm873 = vcmp.lt.s32.totalorder %v857, 200
        %vm874 = vcmp.lt.s32.totalorder %v858, 200
        %vm875 = vcmp.lt.s32.totalorder %v859, 200
        %v876 = vsel %vm860, %v456, 0.0
        %v877 = vsel %vm861, %v458, 0.0
        %v878 = vsel %vm862, %v460, 0.0
        %v879 = vsel %vm863, %v462, 0.0
        %v880 = vsel %vm864, %v464, 0.0
        %v881 = vsel %vm865, %v466, 0.0
        %v882 = vsel %vm866, %v468, 0.0
        %v883 = vsel %vm867, %v470, 0.0
        %v884 = vsel %vm868, %v472, 0.0
        %v885 = vsel %vm869, %v474, 0.0
        %v886 = vsel %vm870, %v476, 0.0
        %v887 = vsel %vm871, %v478, 0.0
        %v888 = vsel %vm872, %v480, 0.0
        %v889 = vsel %vm873, %v482, 0.0
        %v890 = vsel %vm874, %v484, 0.0
        %v891 = vsel %vm875, %v486, 0.0
        %v892 = vsel %vm860, %v809, 0.0
        %v893 = vsel %vm861, %v810, 0.0
        %v894 = vsel %vm862, %v811, 0.0
        %v895 = vsel %vm863, %v812, 0.0
        %v896 = vsel %vm864, %v813, 0.0
        %v897 = vsel %vm865, %v814, 0.0
        %v898 = vsel %vm866, %v815, 0.0
        %v899 = vsel %vm867, %v816, 0.0
        %v900 = vsel %vm868, %v817, 0.0
        %v901 = vsel %vm869, %v818, 0.0
        %v902 = vsel %vm870, %v819, 0.0
        %v903 = vsel %vm871, %v820, 0.0
        %v904 = vsel %vm872, %v821, 0.0
        %v905 = vsel %vm873, %v822, 0.0
        %v906 = vsel %vm874, %v823, 0.0
        %v907 = vsel %vm875, %v824, 0.0
        %vm908 = vcmask 7168
        %909 = vst.msk [vmem:[%s229] sm:$0xff] %vm908, %v876
        %910 = vst.msk [vmem:[%s229 + $0x8] sm:$0xff] %vm908, %v877
        %911 = vst.msk [vmem:[%s229 + $0x10] sm:$0xff] %vm908, %v878
        %912 = vst.msk [vmem:[%s229 + $0x18] sm:$0xff] %vm908, %v879
        %913 = vst.msk [vmem:[%s229 + $0x20] sm:$0xff] %vm908, %v880
        %914 = vst.msk [vmem:[%s229 + $0x28] sm:$0xff] %vm908, %v881
        %915 = vst.msk [vmem:[%s229 + $0x30] sm:$0xff] %vm908, %v882
        %916 = vst.msk [vmem:[%s229 + $0x38] sm:$0xff] %vm908, %v883
        %917 = vst.msk [vmem:[%s229 + $0x40] sm:$0xff] %vm908, %v884
        %918 = vst.msk [vmem:[%s229 + $0x48] sm:$0xff] %vm908, %v885
        %919 = vst.msk [vmem:[%s229 + $0x50] sm:$0xff] %vm908, %v886
        %920 = vst.msk [vmem:[%s229 + $0x58] sm:$0xff] %vm908, %v887
        %921 = vst.msk [vmem:[%s229 + $0x60] sm:$0xff] %vm908, %v888
        %922 = vst.msk [vmem:[%s229 + $0x68] sm:$0xff] %vm908, %v889
        %923 = vst.msk [vmem:[%s229 + $0x70] sm:$0xff] %vm908, %v890
        %924 = vst.msk [vmem:[%s229 + $0x78] sm:$0xff] %vm908, %v891
        %941 = vrot.lane.b32.xlu0 %v892, 1
        %v942 = vpop.permute.xlu0 %941
        %943 = vrot.lane.b32.xlu0 %v893, 1
        %v944 = vpop.permute.xlu0 %943
        %945 = vrot.lane.b32.xlu0 %v894, 1
        %v946 = vpop.permute.xlu0 %945
        %947 = vrot.lane.b32.xlu0 %v895, 1
        %v948 = vpop.permute.xlu0 %947
        %949 = vrot.lane.b32.xlu0 %v896, 1
        %v950 = vpop.permute.xlu0 %949
        %951 = vrot.lane.b32.xlu0 %v897, 1
        %v952 = vpop.permute.xlu0 %951
        %953 = vrot.lane.b32.xlu0 %v898, 1
        %v954 = vpop.permute.xlu0 %953
        %955 = vrot.lane.b32.xlu0 %v899, 1
        %v956 = vpop.permute.xlu0 %955
        %957 = vrot.lane.b32.xlu0 %v900, 1
        %v958 = vpop.permute.xlu0 %957
        %959 = vrot.lane.b32.xlu0 %v901, 1
        %v960 = vpop.permute.xlu0 %959
        %961 = vrot.lane.b32.xlu0 %v902, 1
        %v962 = vpop.permute.xlu0 %961
        %963 = vrot.lane.b32.xlu0 %v903, 1
        %v964 = vpop.permute.xlu0 %963
        %965 = vrot.lane.b32.xlu0 %v904, 1
        %v966 = vpop.permute.xlu0 %965
        %967 = vrot.lane.b32.xlu0 %v905, 1
        %v968 = vpop.permute.xlu0 %967
        %969 = vrot.lane.b32.xlu0 %v906, 1
        %v970 = vpop.permute.xlu0 %969
        %971 = vrot.lane.b32.xlu0 %v907, 1
        %v972 = vpop.permute.xlu0 %971
        %vm989 = vcmask 15368
        %990 = vst.msk [vmem:[%s229] sm:$0xff] %vm989, %v942
        %991 = vst.msk [vmem:[%s229 + $0x8] sm:$0xff] %vm989, %v944
        %992 = vst.msk [vmem:[%s229 + $0x10] sm:$0xff] %vm989, %v946
        %993 = vst.msk [vmem:[%s229 + $0x18] sm:$0xff] %vm989, %v948
        %994 = vst.msk [vmem:[%s229 + $0x20] sm:$0xff] %vm989, %v950
        %995 = vst.msk [vmem:[%s229 + $0x28] sm:$0xff] %vm989, %v952
        %996 = vst.msk [vmem:[%s229 + $0x30] sm:$0xff] %vm989, %v954
        %997 = vst.msk [vmem:[%s229 + $0x38] sm:$0xff] %vm989, %v956
        %998 = vst.msk [vmem:[%s229 + $0x40] sm:$0xff] %vm989, %v958
        %999 = vst.msk [vmem:[%s229 + $0x48] sm:$0xff] %vm989, %v960
        %1000 = vst.msk [vmem:[%s229 + $0x50] sm:$0xff] %vm989, %v962
        %1001 = vst.msk [vmem:[%s229 + $0x58] sm:$0xff] %vm989, %v964
        %1002 = vst.msk [vmem:[%s229 + $0x60] sm:$0xff] %vm989, %v966
        %1003 = vst.msk [vmem:[%s229 + $0x68] sm:$0xff] %vm989, %v968
        %1004 = vst.msk [vmem:[%s229 + $0x70] sm:$0xff] %vm989, %v970
        %1005 = vst.msk [vmem:[%s229 + $0x78] sm:$0xff] %vm989, %v972
        %v1006 = vcvt.s32.f32 %v488
        %v1007 = vmul.f32 %v1006, 0.06666667
        %v1008 = vadd.f32 %v1006, 1.0
        %v1009 = vmul.f32 %v1008, 0.06666667
        %vm1010 = vcmp.gt.f32.partialorder %v876, %v1007
        %vm1011 = vcmp.gt.f32.partialorder %v877, %v1007
        %vm1012 = vcmp.gt.f32.partialorder %v878, %v1007
        %vm1013 = vcmp.gt.f32.partialorder %v879, %v1007
        %vm1014 = vcmp.gt.f32.partialorder %v880, %v1007
        %vm1015 = vcmp.gt.f32.partialorder %v881, %v1007
        %vm1016 = vcmp.gt.f32.partialorder %v882, %v1007
        %vm1017 = vcmp.gt.f32.partialorder %v883, %v1007
        %vm1018 = vcmp.gt.f32.partialorder %v884, %v1007
        %vm1019 = vcmp.gt.f32.partialorder %v885, %v1007
        %vm1020 = vcmp.gt.f32.partialorder %v886, %v1007
        %vm1021 = vcmp.gt.f32.partialorder %v887, %v1007
        %vm1022 = vcmp.gt.f32.partialorder %v888, %v1007
        %vm1023 = vcmp.gt.f32.partialorder %v889, %v1007
        %vm1024 = vcmp.gt.f32.partialorder %v890, %v1007
        %vm1025 = vcmp.gt.f32.partialorder %v891, %v1007
        %vm1026 = vcmp.le.f32.partialorder %v876, %v1009
        %vm1027 = vcmp.le.f32.partialorder %v877, %v1009
        %vm1028 = vcmp.le.f32.partialorder %v878, %v1009
        %vm1029 = vcmp.le.f32.partialorder %v879, %v1009
        %vm1030 = vcmp.le.f32.partialorder %v880, %v1009
        %vm1031 = vcmp.le.f32.partialorder %v881, %v1009
        %vm1032 = vcmp.le.f32.partialorder %v882, %v1009
        %vm1033 = vcmp.le.f32.partialorder %v883, %v1009
        %vm1034 = vcmp.le.f32.partialorder %v884, %v1009
        %vm1035 = vcmp.le.f32.partialorder %v885, %v1009
        %vm1036 = vcmp.le.f32.partialorder %v886, %v1009
        %vm1037 = vcmp.le.f32.partialorder %v887, %v1009
        %vm1038 = vcmp.le.f32.partialorder %v888, %v1009
        %vm1039 = vcmp.le.f32.partialorder %v889, %v1009
        %vm1040 = vcmp.le.f32.partialorder %v890, %v1009
        %vm1041 = vcmp.le.f32.partialorder %v891, %v1009
        %vm1042 = vmand %vm1010, %vm1026
        %vm1043 = vmand %vm1011, %vm1027
        %vm1044 = vmand %vm1012, %vm1028
        %vm1045 = vmand %vm1013, %vm1029
        %vm1046 = vmand %vm1014, %vm1030
        %vm1047 = vmand %vm1015, %vm1031
        %vm1048 = vmand %vm1016, %vm1032
        %vm1049 = vmand %vm1017, %vm1033
        %vm1050 = vmand %vm1018, %vm1034
        %vm1051 = vmand %vm1019, %vm1035
        %vm1052 = vmand %vm1020, %vm1036
        %vm1053 = vmand %vm1021, %vm1037
        %vm1054 = vmand %vm1022, %vm1038
        %vm1055 = vmand %vm1023, %vm1039
        %vm1056 = vmand %vm1024, %vm1040
        %vm1057 = vmand %vm1025, %vm1041
        %v1058 = vsel %vm1042, 1, 0
        %v1059 = vsel %vm1043, 1, 0
        %v1060 = vsel %vm1044, 1, 0
        %v1061 = vsel %vm1045, 1, 0
        %v1062 = vsel %vm1046, 1, 0
        %v1063 = vsel %vm1047, 1, 0
        %v1064 = vsel %vm1048, 1, 0
        %v1065 = vsel %vm1049, 1, 0
        %v1066 = vsel %vm1050, 1, 0
        %v1067 = vsel %vm1051, 1, 0
        %v1068 = vsel %vm1052, 1, 0
        %v1069 = vsel %vm1053, 1, 0
        %v1070 = vsel %vm1054, 1, 0
        %v1071 = vsel %vm1055, 1, 0
        %v1072 = vsel %vm1056, 1, 0
        %v1073 = vsel %vm1057, 1, 0
        %v1074 = vcvt.s32.f32 %v1058
        %v1075 = vcvt.s32.f32 %v1059
        %v1076 = vcvt.s32.f32 %v1060
        %v1077 = vcvt.s32.f32 %v1061
        %v1078 = vcvt.s32.f32 %v1062
        %v1079 = vcvt.s32.f32 %v1063
        %v1080 = vcvt.s32.f32 %v1064
        %v1081 = vcvt.s32.f32 %v1065
        %v1082 = vcvt.s32.f32 %v1066
        %v1083 = vcvt.s32.f32 %v1067
        %v1084 = vcvt.s32.f32 %v1068
        %v1085 = vcvt.s32.f32 %v1069
        %v1086 = vcvt.s32.f32 %v1070
        %v1087 = vcvt.s32.f32 %v1071
        %v1088 = vcvt.s32.f32 %v1072
        %v1089 = vcvt.s32.f32 %v1073
        %vm1090 = vcmask 121856
        %v1091 = vsel %vm1090, %v1074, 0.0
        %v1092 = vsel %vm1090, %v1075, 0.0
        %v1093 = vadd.f32 %v1091, %v1092
        %v1094 = vsel %vm1090, %v1076, 0.0
        %v1095 = vadd.f32 %v1093, %v1094
        %v1096 = vsel %vm1090, %v1077, 0.0
        %v1097 = vadd.f32 %v1095, %v1096
        %v1098 = vsel %vm1090, %v1078, 0.0
        %v1099 = vadd.f32 %v1097, %v1098
        %v1100 = vsel %vm1090, %v1079, 0.0
        %v1101 = vadd.f32 %v1099, %v1100
        %v1102 = vsel %vm1090, %v1080, 0.0
        %v1103 = vadd.f32 %v1101, %v1102
        %v1104 = vsel %vm1090, %v1081, 0.0
        %v1105 = vadd.f32 %v1103, %v1104
        %v1106 = vsel %vm1090, %v1082, 0.0
        %v1107 = vadd.f32 %v1105, %v1106
        %v1108 = vsel %vm1090, %v1083, 0.0
        %v1109 = vadd.f32 %v1107, %v1108
        %v1110 = vsel %vm1090, %v1084, 0.0
        %v1111 = vadd.f32 %v1109, %v1110
        %v1112 = vsel %vm1090, %v1085, 0.0
        %v1113 = vadd.f32 %v1111, %v1112
        %v1114 = vsel %vm1090, %v1086, 0.0
        %v1115 = vadd.f32 %v1113, %v1114
        %v1116 = vsel %vm1090, %v1087, 0.0
        %v1117 = vadd.f32 %v1115, %v1116
        %v1118 = vsel %vm1090, %v1088, 0.0
        %v1119 = vadd.f32 %v1117, %v1118
        %v1120 = vsel %vm1090, %v1089, 0.0
        %v1121 = vadd.f32 %v1119, %v1120
        %v1122 = vrot.slane %v1121, 4
        %v1123 = vadd.f32 %v1121, %v1122
        %v1124 = vrot.slane %v1123, 2
        %v1125 = vadd.f32 %v1123, %v1124
        %v1126 = vrot.slane %v1125, 1
        %v1127 = vadd.f32 %v1125, %v1126
        %vm1128 = vcmask 114688
        %1129 = vst.msk [vmem:[%s272] sm:$0x1] %vm1128, %v1127
        %v1130 = vmul.f32 %v1074, %v876
        %v1131 = vmul.f32 %v1075, %v877
        %v1132 = vmul.f32 %v1076, %v878
        %v1133 = vmul.f32 %v1077, %v879
        %v1134 = vmul.f32 %v1078, %v880
        %v1135 = vmul.f32 %v1079, %v881
        %v1136 = vmul.f32 %v1080, %v882
        %v1137 = vmul.f32 %v1081, %v883
        %v1138 = vmul.f32 %v1082, %v884
        %v1139 = vmul.f32 %v1083, %v885
        %v1140 = vmul.f32 %v1084, %v886
        %v1141 = vmul.f32 %v1085, %v887
        %v1142 = vmul.f32 %v1086, %v888
        %v1143 = vmul.f32 %v1087, %v889
        %v1144 = vmul.f32 %v1088, %v890
        %v1145 = vmul.f32 %v1089, %v891
        %v1146 = vsel %vm1090, %v1130, 0.0
        %v1147 = vsel %vm1090, %v1131, 0.0
        %v1148 = vadd.f32 %v1146, %v1147
        %v1149 = vsel %vm1090, %v1132, 0.0
        %v1150 = vadd.f32 %v1148, %v1149
        %v1151 = vsel %vm1090, %v1133, 0.0
        %v1152 = vadd.f32 %v1150, %v1151
        %v1153 = vsel %vm1090, %v1134, 0.0
        %v1154 = vadd.f32 %v1152, %v1153
        %v1155 = vsel %vm1090, %v1135, 0.0
        %v1156 = vadd.f32 %v1154, %v1155
        %v1157 = vsel %vm1090, %v1136, 0.0
        %v1158 = vadd.f32 %v1156, %v1157
        %v1159 = vsel %vm1090, %v1137, 0.0
        %v1160 = vadd.f32 %v1158, %v1159
        %v1161 = vsel %vm1090, %v1138, 0.0
        %v1162 = vadd.f32 %v1160, %v1161
        %v1163 = vsel %vm1090, %v1139, 0.0
        %v1164 = vadd.f32 %v1162, %v1163
        %v1165 = vsel %vm1090, %v1140, 0.0
        %v1166 = vadd.f32 %v1164, %v1165
        %v1167 = vsel %vm1090, %v1141, 0.0
        %v1168 = vadd.f32 %v1166, %v1167
        %v1169 = vsel %vm1090, %v1142, 0.0
        %v1170 = vadd.f32 %v1168, %v1169
        %v1171 = vsel %vm1090, %v1143, 0.0
        %v1172 = vadd.f32 %v1170, %v1171
        %v1173 = vsel %vm1090, %v1144, 0.0
        %v1174 = vadd.f32 %v1172, %v1173
        %v1175 = vsel %vm1090, %v1145, 0.0
        %v1176 = vadd.f32 %v1174, %v1175
        %v1177 = vrot.slane %v1176, 4
        %v1178 = vadd.f32 %v1176, %v1177
        %v1179 = vrot.slane %v1178, 2
        %v1180 = vadd.f32 %v1178, %v1179
        %v1181 = vrot.slane %v1180, 1
        %v1182 = vadd.f32 %v1180, %v1181
        %1183 = vst.msk [vmem:[%s272 + $0x1] sm:$0x1] %vm1128, %v1182
        %1184 = vset.pattern.permute.xlu0 0
        %1185 = vperm.xlu0 %1184, %v892
        %v1186 = vpop.permute.xlu0 %1185
        %1188 = vset.pattern.permute.xlu0 0
        %1189 = vperm.xlu0 %1188, %v893
        %v1190 = vpop.permute.xlu0 %1189
        %1192 = vset.pattern.permute.xlu0 0
        %1193 = vperm.xlu0 %1192, %v894
        %v1194 = vpop.permute.xlu0 %1193
        %1196 = vset.pattern.permute.xlu0 0
        %1197 = vperm.xlu0 %1196, %v895
        %v1198 = vpop.permute.xlu0 %1197
        %1200 = vset.pattern.permute.xlu0 0
        %1201 = vperm.xlu0 %1200, %v896
        %v1202 = vpop.permute.xlu0 %1201
        %1204 = vset.pattern.permute.xlu0 0
        %1205 = vperm.xlu0 %1204, %v897
        %v1206 = vpop.permute.xlu0 %1205
        %1208 = vset.pattern.permute.xlu0 0
        %1209 = vperm.xlu0 %1208, %v898
        %v1210 = vpop.permute.xlu0 %1209
        %1212 = vset.pattern.permute.xlu0 0
        %1213 = vperm.xlu0 %1212, %v899
        %v1214 = vpop.permute.xlu0 %1213
        %1216 = vset.pattern.permute.xlu0 0
        %1217 = vperm.xlu0 %1216, %v900
        %v1218 = vpop.permute.xlu0 %1217
        %1220 = vset.pattern.permute.xlu0 0
        %1221 = vperm.xlu0 %1220, %v901
        %v1222 = vpop.permute.xlu0 %1221
        %1224 = vset.pattern.permute.xlu0 0
        %1225 = vperm.xlu0 %1224, %v902
        %v1226 = vpop.permute.xlu0 %1225
        %1228 = vset.pattern.permute.xlu0 0
        %1229 = vperm.xlu0 %1228, %v903
        %v1230 = vpop.permute.xlu0 %1229
        %1232 = vset.pattern.permute.xlu0 0
        %1233 = vperm.xlu0 %1232, %v904
        %v1234 = vpop.permute.xlu0 %1233
        %1236 = vset.pattern.permute.xlu0 0
        %1237 = vperm.xlu0 %1236, %v905
        %v1238 = vpop.permute.xlu0 %1237
        %1240 = vset.pattern.permute.xlu0 0
        %1241 = vperm.xlu0 %1240, %v906
        %v1242 = vpop.permute.xlu0 %1241
        %1244 = vset.pattern.permute.xlu0 0
        %1245 = vperm.xlu0 %1244, %v907
        %v1246 = vpop.permute.xlu0 %1245
        %v1248 = vmul.f32 %v1074, %v1186
        %v1249 = vmul.f32 %v1075, %v1190
        %v1250 = vmul.f32 %v1076, %v1194
        %v1251 = vmul.f32 %v1077, %v1198
        %v1252 = vmul.f32 %v1078, %v1202
        %v1253 = vmul.f32 %v1079, %v1206
        %v1254 = vmul.f32 %v1080, %v1210
        %v1255 = vmul.f32 %v1081, %v1214
        %v1256 = vmul.f32 %v1082, %v1218
        %v1257 = vmul.f32 %v1083, %v1222
        %v1258 = vmul.f32 %v1084, %v1226
        %v1259 = vmul.f32 %v1085, %v1230
        %v1260 = vmul.f32 %v1086, %v1234
        %v1261 = vmul.f32 %v1087, %v1238
        %v1262 = vmul.f32 %v1088, %v1242
        %v1263 = vmul.f32 %v1089, %v1246
        %v1264 = vsel %vm1090, %v1248, 0.0
        %v1265 = vsel %vm1090, %v1249, 0.0
        %v1266 = vadd.f32 %v1264, %v1265
        %v1267 = vsel %vm1090, %v1250, 0.0
        %v1268 = vadd.f32 %v1266, %v1267
        %v1269 = vsel %vm1090, %v1251, 0.0
        %v1270 = vadd.f32 %v1268, %v1269
        %v1271 = vsel %vm1090, %v1252, 0.0
        %v1272 = vadd.f32 %v1270, %v1271
        %v1273 = vsel %vm1090, %v1253, 0.0
        %v1274 = vadd.f32 %v1272, %v1273
        %v1275 = vsel %vm1090, %v1254, 0.0
        %v1276 = vadd.f32 %v1274, %v1275
        %v1277 = vsel %vm1090, %v1255, 0.0
        %v1278 = vadd.f32 %v1276, %v1277
        %v1279 = vsel %vm1090, %v1256, 0.0
        %v1280 = vadd.f32 %v1278, %v1279
        %v1281 = vsel %vm1090, %v1257, 0.0
        %v1282 = vadd.f32 %v1280, %v1281
        %v1283 = vsel %vm1090, %v1258, 0.0
        %v1284 = vadd.f32 %v1282, %v1283
        %v1285 = vsel %vm1090, %v1259, 0.0
        %v1286 = vadd.f32 %v1284, %v1285
        %v1287 = vsel %vm1090, %v1260, 0.0
        %v1288 = vadd.f32 %v1286, %v1287
        %v1289 = vsel %vm1090, %v1261, 0.0
        %v1290 = vadd.f32 %v1288, %v1289
        %v1291 = vsel %vm1090, %v1262, 0.0
        %v1292 = vadd.f32 %v1290, %v1291
        %v1293 = vsel %vm1090, %v1263, 0.0
        %v1294 = vadd.f32 %v1292, %v1293
        %v1295 = vrot.slane %v1294, 4
        %v1296 = vadd.f32 %v1294, %v1295
        %v1297 = vrot.slane %v1296, 2
        %v1298 = vadd.f32 %v1296, %v1297
        %v1299 = vrot.slane %v1298, 1
        %v1300 = vadd.f32 %v1298, %v1299
        %1301 = vst.msk [vmem:[%s272 + $0x2] sm:$0x1] %vm1128, %v1300
        %s1302 = sand.u32 %s98, 1
        %s1303 = sand.u32 %s98, 1
        %s1304 = smul.addr %s1303, 128
        %s1305 = scalar_lea.vmem [#allocation3], %s1304
        %p1306 = scmp.lt.s32.totalorder %s17, 1
        %s1307 = scalar_select %p1306, %s17, 1
        %s1308 = smul.addr %s1307, 4
        %s1309 = scalar_lea.vmem %s4, %s1308
        // Predicated region
        $region33: #{_run_kernel.1} parent=31 // pred_check
          %p1310 = pneg %p108
        $region34: #{_run_kernel.1} parent=31 // pred_check_branch
          %1312 = sbr.rel (%p1310) target = $region36
        $region35: #{_run_kernel.1} parent=31 // pred_region
          %s1313 = smul.u32 16, %s17
          %s1314 = ssub.s32 25, %s1313
          %p1315 = scmp.lt.s32.totalorder %s1314, 16
          %s1316 = scalar_select %p1315, %s1314, 16
          %s1317 = smul.u32 128, %s1316
          %p1318 = scmp.ne.s32.totalorder 0, %s1317
          %s1319 = smul.addr %s1313, 8
          %s1320 = scalar_lea.vmem %s3, %s1319
          // Predicated region
          $region37: #{_run_kernel.1} parent=35 // pred_check
            %p1321 = pneg %p1318
          $region38: #{_run_kernel.1} parent=35 // pred_check_branch
            %1323 = sbr.rel (%p1321) target = $region40
          $region39: #{_run_kernel.1} parent=35 // pred_region
            // Predicated region
            $region41: #{_run_kernel.1} parent=39 // pred_check
              _
            $region42: #{_run_kernel.1} parent=39 // pred_check_branch
              %1325 = sbr.rel (0) target = $region44
            $region43: #{_run_kernel.1} parent=39 // pred_region
              // Predicated region
              $region63: #{_run_kernel.1} parent=43 // pred_check
                _
              $region64: #{_run_kernel.1} parent=43 // pred_check_branch
                %1405 = sbr.rel (0) target = $region66
              $region65: #{_run_kernel.1} parent=43 // pred_region
                %s1406 = sshrl.u32 %s1316, 4
                // While loop
                $region67: #{_run_kernel.1} parent=65 // loop_pre_header
                  _
                $region68: #{_run_kernel.1} parent=65 // loop_header
                  %s1408 = sphi 0, %s1410
                  %p1409 = scmp.ge.s32.totalorder %s1408, %s1406
                  %s1413 = sphi 0, %s1450
                  %s1414 = sphi %s1305, %s1453
                  %s1415 = sphi %s1320, %s1454
                $region69: #{_run_kernel.1} parent=65 // loop_header_branch
                  %1412 = sbr.rel (%p1409) target = $region73
                $region70: #{_run_kernel.1} parent=65 // loop_body
                  %v1416 = vld [vmem:[%s1414] sm:$0xff]
                  %1417 = vst [vmem:[%s1415] sm:$0xff] %v1416
                  %v1418 = vld [vmem:[%s1414 + $0x8] sm:$0xff]
                  %1419 = vst [vmem:[%s1415 + $0x8] sm:$0xff] %v1418
                  %v1420 = vld [vmem:[%s1414 + $0x10] sm:$0xff]
                  %1421 = vst [vmem:[%s1415 + $0x10] sm:$0xff] %v1420
                  %v1422 = vld [vmem:[%s1414 + $0x18] sm:$0xff]
                  %1423 = vst [vmem:[%s1415 + $0x18] sm:$0xff] %v1422
                  %v1424 = vld [vmem:[%s1414 + $0x20] sm:$0xff]
                  %1425 = vst [vmem:[%s1415 + $0x20] sm:$0xff] %v1424
                  %v1426 = vld [vmem:[%s1414 + $0x28] sm:$0xff]
                  %1427 = vst [vmem:[%s1415 + $0x28] sm:$0xff] %v1426
                  %v1428 = vld [vmem:[%s1414 + $0x30] sm:$0xff]
                  %1429 = vst [vmem:[%s1415 + $0x30] sm:$0xff] %v1428
                  %v1430 = vld [vmem:[%s1414 + $0x38] sm:$0xff]
                  %1431 = vst [vmem:[%s1415 + $0x38] sm:$0xff] %v1430
                  %v1432 = vld [vmem:[%s1414 + $0x40] sm:$0xff]
                  %1433 = vst [vmem:[%s1415 + $0x40] sm:$0xff] %v1432
                  %v1434 = vld [vmem:[%s1414 + $0x48] sm:$0xff]
                  %1435 = vst [vmem:[%s1415 + $0x48] sm:$0xff] %v1434
                  %v1436 = vld [vmem:[%s1414 + $0x50] sm:$0xff]
                  %1437 = vst [vmem:[%s1415 + $0x50] sm:$0xff] %v1436
                  %v1438 = vld [vmem:[%s1414 + $0x58] sm:$0xff]
                  %1439 = vst [vmem:[%s1415 + $0x58] sm:$0xff] %v1438
                  %v1440 = vld [vmem:[%s1414 + $0x60] sm:$0xff]
                  %1441 = vst [vmem:[%s1415 + $0x60] sm:$0xff] %v1440
                  %v1442 = vld [vmem:[%s1414 + $0x68] sm:$0xff]
                  %1443 = vst [vmem:[%s1415 + $0x68] sm:$0xff] %v1442
                  %v1444 = vld [vmem:[%s1414 + $0x70] sm:$0xff]
                  %1445 = vst [vmem:[%s1415 + $0x70] sm:$0xff] %v1444
                  %v1446 = vld [vmem:[%s1414 + $0x78] sm:$0xff]
                  %1447 = vst [vmem:[%s1415 + $0x78] sm:$0xff] %v1446
                  %s1448 = sadd.s32 1, %s1413
                  %p1449 = scmp.ge.s32.totalorder %s1448, %s1406
                  %s1450 = scalar_select %p1449, 0, %s1448
                  %s1451 = smul.u32 %s1450, 128
                  %s1452 = smul.u32 %s1450, 128
                  %s1453 = scalar_lea.vmem %s1305, %s1451 [#allocation3]
                  %s1454 = scalar_lea.vmem %s1320, %s1452
                $region71: #{_run_kernel.1} parent=65 // loop_footer
                  %s1410 = sadd.s32 %s1408, 1
                $region72: #{_run_kernel.1} parent=65 // loop_footer_branch
                  %1407 = sbr.rel target = $region68
                $region73: #{_run_kernel.1} parent=65 // loop_exit
                  _
                %s1455 = sshrl.u32 %s1316, 4
                %s1456 = sand.u32 %s1316, 15
                %s1457 = smul.u32 %s1455, 16
                %s1458 = smul.u32 8, %s1457
                %s1459 = scalar_lea.vmem %s1305, %s1458 [#allocation3]
                %s1460 = smul.u32 8, %s1457
                %s1461 = scalar_lea.vmem %s1320, %s1460
                // While loop
                $region74: #{_run_kernel.1} parent=65 // loop_pre_header
                  _
                $region75: #{_run_kernel.1} parent=65 // loop_header
                  %s1463 = sphi 0, %s1465
                  %p1464 = scmp.ge.s32.totalorder %s1463, %s1456
                  %s1468 = sphi 0, %s1475
                  %s1469 = sphi %s1459, %s1478
                  %s1470 = sphi %s1461, %s1479
                $region76: #{_run_kernel.1} parent=65 // loop_header_branch
                  %1467 = sbr.rel (%p1464) target = $region80
                $region77: #{_run_kernel.1} parent=65 // loop_body
                  %v1471 = vld [vmem:[%s1469] sm:$0xff]
                  %1472 = vst [vmem:[%s1470] sm:$0xff] %v1471
                  %s1473 = sadd.s32 1, %s1468
                  %p1474 = scmp.ge.s32.totalorder %s1473, %s1456
                  %s1475 = scalar_select %p1474, 0, %s1473
                  %s1476 = smul.u32 %s1475, 8
                  %s1477 = smul.u32 %s1475, 8
                  %s1478 = scalar_lea.vmem %s1459, %s1476 [#allocation3]
                  %s1479 = scalar_lea.vmem %s1461, %s1477
                $region78: #{_run_kernel.1} parent=65 // loop_footer
                  %s1465 = sadd.s32 %s1463, 1
                $region79: #{_run_kernel.1} parent=65 // loop_footer_branch
                  %1462 = sbr.rel target = $region75
                $region80: #{_run_kernel.1} parent=65 // loop_exit
                  _
              $region66: #{_run_kernel.1} parent=43 // pred_fallthru
                _
              // Predicated region
              $region81: #{_run_kernel.1} parent=43 // pred_check
                _
              $region82: #{_run_kernel.1} parent=43 // pred_check_branch
                %1481 = sbr.rel target = $region84
              $region83: #{_run_kernel.1} parent=43 // pred_region
                _
              $region84: #{_run_kernel.1} parent=43 // pred_fallthru
                _
            $region44: #{_run_kernel.1} parent=39 // pred_fallthru
              _
            // Predicated region
            $region45: #{_run_kernel.1} parent=39 // pred_check
              _
            $region46: #{_run_kernel.1} parent=39 // pred_check_branch
              %1327 = sbr.rel target = $region48
            $region47: #{_run_kernel.1} parent=39 // pred_region
              %s1329 = ssub.s32 256, 1
              %s1330 = sshrl.u32 %s1316, 4
              // While loop
              $region49: #{_run_kernel.1} parent=47 // loop_pre_header
                _
              $region50: #{_run_kernel.1} parent=47 // loop_header
                %s1332 = sphi 0, %s1334
                %p1333 = scmp.ge.s32.totalorder %s1332, %s1330
                %s1337 = sphi 0, %s1374
                %s1338 = sphi %s1305, %s1377
                %s1339 = sphi %s1320, %s1378
              $region51: #{_run_kernel.1} parent=47 // loop_header_branch
                %1336 = sbr.rel (%p1333) target = $region55
              $region52: #{_run_kernel.1} parent=47 // loop_body
                %v1340 = vld [vmem:[%s1338] sm:%s1329]
                %1341 = vst [vmem:[%s1339] sm:%s1329] %v1340
                %v1342 = vld [vmem:[%s1338 + $0x8] sm:%s1329]
                %1343 = vst [vmem:[%s1339 + $0x8] sm:%s1329] %v1342
                %v1344 = vld [vmem:[%s1338 + $0x10] sm:%s1329]
                %1345 = vst [vmem:[%s1339 + $0x10] sm:%s1329] %v1344
                %v1346 = vld [vmem:[%s1338 + $0x18] sm:%s1329]
                %1347 = vst [vmem:[%s1339 + $0x18] sm:%s1329] %v1346
                %v1348 = vld [vmem:[%s1338 + $0x20] sm:%s1329]
                %1349 = vst [vmem:[%s1339 + $0x20] sm:%s1329] %v1348
                %v1350 = vld [vmem:[%s1338 + $0x28] sm:%s1329]
                %1351 = vst [vmem:[%s1339 + $0x28] sm:%s1329] %v1350
                %v1352 = vld [vmem:[%s1338 + $0x30] sm:%s1329]
                %1353 = vst [vmem:[%s1339 + $0x30] sm:%s1329] %v1352
                %v1354 = vld [vmem:[%s1338 + $0x38] sm:%s1329]
                %1355 = vst [vmem:[%s1339 + $0x38] sm:%s1329] %v1354
                %v1356 = vld [vmem:[%s1338 + $0x40] sm:%s1329]
                %1357 = vst [vmem:[%s1339 + $0x40] sm:%s1329] %v1356
                %v1358 = vld [vmem:[%s1338 + $0x48] sm:%s1329]
                %1359 = vst [vmem:[%s1339 + $0x48] sm:%s1329] %v1358
                %v1360 = vld [vmem:[%s1338 + $0x50] sm:%s1329]
                %1361 = vst [vmem:[%s1339 + $0x50] sm:%s1329] %v1360
                %v1362 = vld [vmem:[%s1338 + $0x58] sm:%s1329]
                %1363 = vst [vmem:[%s1339 + $0x58] sm:%s1329] %v1362
                %v1364 = vld [vmem:[%s1338 + $0x60] sm:%s1329]
                %1365 = vst [vmem:[%s1339 + $0x60] sm:%s1329] %v1364
                %v1366 = vld [vmem:[%s1338 + $0x68] sm:%s1329]
                %1367 = vst [vmem:[%s1339 + $0x68] sm:%s1329] %v1366
                %v1368 = vld [vmem:[%s1338 + $0x70] sm:%s1329]
                %1369 = vst [vmem:[%s1339 + $0x70] sm:%s1329] %v1368
                %v1370 = vld [vmem:[%s1338 + $0x78] sm:%s1329]
                %1371 = vst [vmem:[%s1339 + $0x78] sm:%s1329] %v1370
                %s1372 = sadd.s32 1, %s1337
                %p1373 = scmp.ge.s32.totalorder %s1372, %s1330
                %s1374 = scalar_select %p1373, 0, %s1372
                %s1375 = smul.u32 %s1374, 128
                %s1376 = smul.u32 %s1374, 128
                %s1377 = scalar_lea.vmem %s1305, %s1375 [#allocation3]
                %s1378 = scalar_lea.vmem %s1320, %s1376
              $region53: #{_run_kernel.1} parent=47 // loop_footer
                %s1334 = sadd.s32 %s1332, 1
              $region54: #{_run_kernel.1} parent=47 // loop_footer_branch
                %1331 = sbr.rel target = $region50
              $region55: #{_run_kernel.1} parent=47 // loop_exit
                _
              %s1379 = sshrl.u32 %s1316, 4
              %s1380 = sand.u32 %s1316, 15
              %s1381 = smul.u32 %s1379, 16
              %s1382 = smul.u32 8, %s1381
              %s1383 = scalar_lea.vmem %s1305, %s1382 [#allocation3]
              %s1384 = smul.u32 8, %s1381
              %s1385 = scalar_lea.vmem %s1320, %s1384
              // While loop
              $region56: #{_run_kernel.1} parent=47 // loop_pre_header
                _
              $region57: #{_run_kernel.1} parent=47 // loop_header
                %s1387 = sphi 0, %s1389
                %p1388 = scmp.ge.s32.totalorder %s1387, %s1380
                %s1392 = sphi 0, %s1399
                %s1393 = sphi %s1383, %s1402
                %s1394 = sphi %s1385, %s1403
              $region58: #{_run_kernel.1} parent=47 // loop_header_branch
                %1391 = sbr.rel (%p1388) target = $region62
              $region59: #{_run_kernel.1} parent=47 // loop_body
                %v1395 = vld [vmem:[%s1393] sm:%s1329]
                %1396 = vst [vmem:[%s1394] sm:%s1329] %v1395
                %s1397 = sadd.s32 1, %s1392
                %p1398 = scmp.ge.s32.totalorder %s1397, %s1380
                %s1399 = scalar_select %p1398, 0, %s1397
                %s1400 = smul.u32 %s1399, 8
                %s1401 = smul.u32 %s1399, 8
                %s1402 = scalar_lea.vmem %s1383, %s1400 [#allocation3]
                %s1403 = scalar_lea.vmem %s1385, %s1401
              $region60: #{_run_kernel.1} parent=47 // loop_footer
                %s1389 = sadd.s32 %s1387, 1
              $region61: #{_run_kernel.1} parent=47 // loop_footer_branch
                %1386 = sbr.rel target = $region57
              $region62: #{_run_kernel.1} parent=47 // loop_exit
                _
            $region48: #{_run_kernel.1} parent=39 // pred_fallthru
              _
          $region40: #{_run_kernel.1} parent=35 // pred_fallthru
            _
          %1482 = vnop
        $region36: #{_run_kernel.1} parent=31 // pred_fallthru
          _
        // Predicated region
        $region85: #{_run_kernel.1} parent=31 // pred_check
          %p1483 = pneg %p134
        $region86: #{_run_kernel.1} parent=31 // pred_check_branch
          %1485 = sbr.rel (%p1483) target = $region88
        $region87: #{_run_kernel.1} parent=31 // pred_region
          _
        $region88: #{_run_kernel.1} parent=31 // pred_fallthru
          _
      $region32: #{_run_kernel.1} parent=5 // pred_fallthru
        _
      %p1486 = scmp.le.s32.totalorder 2, %s12
      // Predicated region
      $region89: #{_run_kernel.1} parent=5 // pred_check
        %p1487 = pneg %p1486
      $region90: #{_run_kernel.1} parent=5 // pred_check_branch
        %1489 = sbr.rel (%p1487) target = $region92
      $region91: #{_run_kernel.1} parent=5 // pred_region
        %s1490 = ssub.s32 %s12, 2
        // Predicated region
        $region93: #{_run_kernel.1} parent=91 // pred_check
          %p1491 = pneg %p114
        $region94: #{_run_kernel.1} parent=91 // pred_check_branch
          %1493 = sbr.rel (%p1491) target = $region96
        $region95: #{_run_kernel.1} parent=91 // pred_region
          %s1494 = sand.u32 %s99, 1
          %s1495 = sand.u32 %s99, 1
          %s1496 = smul.addr %s1495, 128
          %s1497 = scalar_lea.vmem [#allocation3], %s1496
        $region96: #{_run_kernel.1} parent=91 // pred_fallthru
          _
        // Predicated region
        $region97: #{_run_kernel.1} parent=91 // pred_check
          %p1498 = pneg %p140
        $region98: #{_run_kernel.1} parent=91 // pred_check_branch
          %1500 = sbr.rel (%p1498) target = $region100
        $region99: #{_run_kernel.1} parent=91 // pred_region
          %p1501 = scmp.lt.s32.totalorder %s18, 1
          %s1502 = scalar_select %p1501, %s18, 1
          %s1503 = smul.addr %s1502, 4
          %s1504 = scalar_lea.vmem %s4, %s1503
        $region100: #{_run_kernel.1} parent=91 // pred_fallthru
          _
      $region92: #{_run_kernel.1} parent=5 // pred_fallthru
        _
    $region6: #{_run_kernel.1} parent=1 // loop_footer
      %s16 = sadd.s32 1, %s12
    $region7: #{_run_kernel.1} parent=1 // loop_footer_branch
      %11 = sbr.rel target = $region3
    $region8: #{_run_kernel.1} parent=1 // loop_exit
      _

</llo_original>
